<compile_context>
chip_gen: v6e
topology: v6e:2x2x1
jax: 0.10.0
libtpu: 0.0.40
codegen_flags: <defaults>
</compile_context>

<pallas_src>
import jax
import jax.numpy as jnp
from jax.experimental import pallas as pl
from jax.experimental.pallas import tpu as pltpu


def _critic_kernel(x_ref, u_ref, w1x_ref, w1u_ref, w2_ref, w3_ref, b_ref, q_ref):
    """One twin-Q branch per grid step; every ref already selects this branch."""
    x = x_ref[...].astype(jnp.bfloat16)            # (B, state_dim)
    u = u_ref[...].astype(jnp.bfloat16)            # (B, action_dim)
    b = b_ref[...]                                 # (3, hidden) f32 packed biases

    # l1 / l4:  [x, u] @ W1 + b1  ==  x @ W1x + u @ W1u + b1   (concat folded in)
    h = (jnp.dot(x, w1x_ref[...], preferred_element_type=jnp.float32)
         + jnp.dot(u, w1u_ref[...], preferred_element_type=jnp.float32)
         + b[0:1, :])
    h = jnp.maximum(h, 0.0).astype(jnp.bfloat16)

    # l2 / l5
    h = jnp.dot(h, w2_ref[...], preferred_element_type=jnp.float32) + b[1:2, :]
    h = jnp.maximum(h, 0.0).astype(jnp.bfloat16)

    # l3 / l6  (512 -> 1)
    q = jnp.dot(h, w3_ref[...], preferred_element_type=jnp.float32) + b[2:3, 0:1]
    q_ref[...] = q.astype(q_ref.dtype)


def critic_forward(x, u, params):
    """Pallas implementation of Critic.forward -> (q1, q2), each (B, 1) f32."""
    w1x, w1u, w2, w3, b = params
    B, state_dim = x.shape
    action_dim = u.shape[1]
    hidden = w2.shape[-1]

    branch = lambda i: (i, 0, 0)     # per-branch blocks (weights, biases, output)
    shared = lambda i: (0, 0)        # x / u stay resident across both grid steps

    out = pl.pallas_call(
        _critic_kernel,
        out_shape=jax.ShapeDtypeStruct((2, B, 1), jnp.float32),
        grid_spec=pl.GridSpec(
            grid=(2,),               # one grid step per twin-Q branch
            in_specs=[
                pl.BlockSpec((B, state_dim), shared),            # x
                pl.BlockSpec((B, action_dim), shared),           # u
                pl.BlockSpec((None, state_dim, hidden), branch),  # W1x (bf16)
                pl.BlockSpec((None, action_dim, hidden), branch), # W1u (bf16)
                pl.BlockSpec((None, hidden, hidden), branch),     # W2  (bf16)
                pl.BlockSpec((None, hidden, 1), branch),          # W3  (bf16)
                pl.BlockSpec((None, 3, hidden), branch),          # packed biases (f32)
            ],
            out_specs=pl.BlockSpec((None, B, 1), branch),
        ),
        compiler_params=pltpu.CompilerParams(
            # Twin branches are independent: sharded across TCs on v7x,
            # pipelined sequentially on v5e/v6e.
            dimension_semantics=("parallel",)),
    )(x, u, w1x, w1u, w2, w3, b)
    return out[0], out[1]


def init_critic_params(key, state_dim, action_dim=7, hidden=512, bias_scale=0.0):
    """Xavier-normal weights (bf16 storage), biases bias_scale*N(0,1) (f32).

    bias_scale=0.0 matches the PyTorch weights_init (constant-0 bias); a
    nonzero value is used in the self-test purely to exercise the bias path.
    """
    input_dim = state_dim + action_dim

    def xavier(k, fan_in, fan_out):
        std = jnp.sqrt(2.0 / (fan_in + fan_out)).astype(jnp.float32)
        return jax.random.normal(k, (fan_in, fan_out), dtype=jnp.float32) * std

    ks = jax.random.split(key, 7)

    def layer1(k):
        w = xavier(k, input_dim, hidden)          # (state+action, hidden)
        return w[:state_dim], w[state_dim:]       # split so concat folds into kernel

    w1x_a, w1u_a = layer1(ks[0])
    w1x_b, w1u_b = layer1(ks[3])
    w2_a, w2_b = xavier(ks[1], hidden, hidden), xavier(ks[4], hidden, hidden)
    w3_a, w3_b = xavier(ks[2], hidden, 1), xavier(ks[5], hidden, 1)

    w1x = jnp.stack([w1x_a, w1x_b]).astype(jnp.bfloat16)   # (2, state_dim, hidden)
    w1u = jnp.stack([w1u_a, w1u_b]).astype(jnp.bfloat16)   # (2, action_dim, hidden)
    w2 = jnp.stack([w2_a, w2_b]).astype(jnp.bfloat16)      # (2, hidden, hidden)
    w3 = jnp.stack([w3_a, w3_b]).astype(jnp.bfloat16)      # (2, hidden, 1)

    # Packed biases: row 0 = b1/b4, row 1 = b2/b5, row 2 = [b3/b6, 0, ...].
    b = bias_scale * jax.random.normal(ks[6], (2, 3, hidden), dtype=jnp.float32)
    b = b.at[:, 2, 1:].set(0.0)   # only element 0 of the last-layer bias row is real
    return (w1x, w1u, w2, w3, b)


if __name__ == "__main__":
    state_dim, action_dim, batch, hidden = 24, 7, 8, 512

    key = jax.random.PRNGKey(0)
    kx, ku, kp = jax.random.split(key, 3)
    x = jax.random.normal(kx, (batch, state_dim), dtype=jnp.float32)
    u = jax.random.normal(ku, (batch, action_dim), dtype=jnp.float32)
    # nonzero biases only to exercise the bias path in the self-test
    params = init_critic_params(kp, state_dim, action_dim, hidden, bias_scale=0.05)

    q1, q2 = critic_forward(x, u, params)
    jax.block_until_ready((q1, q2))
    assert q1.shape == (batch, 1) and q2.shape == (batch, 1)

    # Reference 1: mirrors the kernel numerics (bf16 weights/acts, f32 accum).
    def ref_bf16(x, u, p):
        w1x, w1u, w2, w3, b = p
        xb, ub = x.astype(jnp.bfloat16), u.astype(jnp.bfloat16)

        def br(i):
            h = (jnp.dot(xb, w1x[i], preferred_element_type=jnp.float32)
                 + jnp.dot(ub, w1u[i], preferred_element_type=jnp.float32) + b[i, 0])
            h = jnp.maximum(h, 0.0).astype(jnp.bfloat16)
            h = jnp.dot(h, w2[i], preferred_element_type=jnp.float32) + b[i, 1]
            h = jnp.maximum(h, 0.0).astype(jnp.bfloat16)
            return jnp.dot(h, w3[i], preferred_element_type=jnp.float32) + b[i, 2, 0]

        return br(0), br(1)

    # Reference 2: full-f32 "PyTorch semantics" ([x, u] @ W1, ReLU, ...).
    def ref_f32(x, u, p):
        w1x, w1u, w2, w3, b = p
        xu = jnp.concatenate([x, u], axis=-1)

        def br(i):
            w1 = jnp.concatenate([w1x[i], w1u[i]], axis=0).astype(jnp.float32)
            h = jnp.maximum(xu @ w1 + b[i, 0], 0.0)
            h = jnp.maximum(h @ w2[i].astype(jnp.float32) + b[i, 1], 0.0)
            return h @ w3[i].astype(jnp.float32) + b[i, 2, 0]

        return br(0), br(1)

    r1, r2 = ref_bf16(x, u, params)
    f1, f2 = ref_f32(x, u, params)
    assert jnp.allclose(q1, r1, atol=2e-3, rtol=2e-3), float(jnp.max(jnp.abs(q1 - r1)))
    assert jnp.allclose(q2, r2, atol=2e-3, rtol=2e-3), float(jnp.max(jnp.abs(q2 - r2)))
    assert jnp.allclose(q1, f1, atol=5e-2, rtol=5e-2), float(jnp.max(jnp.abs(q1 - f1)))
    assert jnp.allclose(q2, f2, atol=5e-2, rtol=5e-2), float(jnp.max(jnp.abs(q2 - f2)))

    print("KERNEL_OK")
</pallas_src>

<mosaic_0001>
module attributes {stable_mosaic.version = 11 : i64} {
  func.func @_critic_kernel(%arg0: i32, %arg1: memref<8x24xf32, #tpu.memory_space<vmem>>, %arg2: memref<8x7xf32, #tpu.memory_space<vmem>>, %arg3: memref<1x24x512xbf16, #tpu.memory_space<vmem>>, %arg4: memref<1x7x512xbf16, #tpu.memory_space<vmem>>, %arg5: memref<1x512x512xbf16, #tpu.memory_space<vmem>>, %arg6: memref<1x512x1xbf16, #tpu.memory_space<vmem>>, %arg7: memref<1x3x512xf32, #tpu.memory_space<vmem>>, %arg8: memref<1x8x1xf32, #tpu.memory_space<vmem>>) attributes {dimension_semantics = [#tpu.dimension_semantics<parallel>], iteration_bounds = array<i64: 2>, scalar_prefetch = 0 : i64, scratch_operands = 0 : i64, tpu.core_type = #tpu.core_type<tc>, window_params = [{pipeline_mode = #tpu.pipeline_mode<synchronous>, transform_indices = @transform_0, window_bounds = array<i64: 8, 24>}, {pipeline_mode = #tpu.pipeline_mode<synchronous>, transform_indices = @transform_1, window_bounds = array<i64: 8, 7>}, {transform_indices = @transform_2, window_bounds = array<i64: 1, 24, 512>}, {transform_indices = @transform_3, window_bounds = array<i64: 1, 7, 512>}, {transform_indices = @transform_4, window_bounds = array<i64: 1, 512, 512>}, {transform_indices = @transform_5, window_bounds = array<i64: 1, 512, 1>}, {transform_indices = @transform_6, window_bounds = array<i64: 1, 3, 512>}, {transform_indices = @transform_7, window_bounds = array<i64: 1, 8, 1>}]} {
    %c0 = arith.constant 0 : index
    %c0_0 = arith.constant 0 : index
    %0 = vector.load %arg1[%c0, %c0_0] : memref<8x24xf32, #tpu.memory_space<vmem>>, vector<8x24xf32>
    %1 = arith.truncf %0 : vector<8x24xf32> to vector<8x24xbf16>
    %c0_1 = arith.constant 0 : index
    %c0_2 = arith.constant 0 : index
    %2 = vector.load %arg2[%c0_1, %c0_2] : memref<8x7xf32, #tpu.memory_space<vmem>>, vector<8x7xf32>
    %3 = arith.truncf %2 : vector<8x7xf32> to vector<8x7xbf16>
    %c0_3 = arith.constant 0 : index
    %c0_4 = arith.constant 0 : index
    %c0_5 = arith.constant 0 : index
    %4 = vector.load %arg7[%c0_3, %c0_4, %c0_5] : memref<1x3x512xf32, #tpu.memory_space<vmem>>, vector<1x3x512xf32>
    %5 = vector.shape_cast %4 : vector<1x3x512xf32> to vector<3x512xf32>
    %c0_6 = arith.constant 0 : index
    %c0_7 = arith.constant 0 : index
    %c0_8 = arith.constant 0 : index
    %6 = vector.load %arg3[%c0_6, %c0_7, %c0_8] : memref<1x24x512xbf16, #tpu.memory_space<vmem>>, vector<1x24x512xbf16>
    %7 = vector.shape_cast %6 : vector<1x24x512xbf16> to vector<24x512xbf16>
    %cst = arith.constant dense<0.000000e+00> : vector<8x512xf32>
    %8 = tpu.matmul %1, %7, %cst {dimension_numbers = #tpu.dot_dimension_numbers<[1], [0], [0], [1], [0, 0, 1, 1], [], []>} : vector<8x24xbf16>, vector<24x512xbf16>, vector<8x512xf32> -> vector<8x512xf32>
    %c0_9 = arith.constant 0 : index
    %c0_10 = arith.constant 0 : index
    %c0_11 = arith.constant 0 : index
    %9 = vector.load %arg4[%c0_9, %c0_10, %c0_11] : memref<1x7x512xbf16, #tpu.memory_space<vmem>>, vector<1x7x512xbf16>
    %10 = vector.shape_cast %9 : vector<1x7x512xbf16> to vector<7x512xbf16>
    %cst_12 = arith.constant dense<0.000000e+00> : vector<8x512xf32>
    %11 = tpu.matmul %3, %10, %cst_12 {dimension_numbers = #tpu.dot_dimension_numbers<[1], [0], [0], [1], [0, 0, 1, 1], [], []>} : vector<8x7xbf16>, vector<7x512xbf16>, vector<8x512xf32> -> vector<8x512xf32>
    %12 = arith.addf %8, %11 : vector<8x512xf32>
    %13 = vector.extract_strided_slice %5 {offsets = [0, 0], sizes = [1, 512], strides = [1, 1]} : vector<3x512xf32> to vector<1x512xf32>
    %14 = vector.broadcast %13 : vector<1x512xf32> to vector<8x512xf32>
    %15 = arith.addf %12, %14 : vector<8x512xf32>
    %cst_13 = arith.constant 0.000000e+00 : f32
    %16 = vector.broadcast %cst_13 : f32 to vector<8x512xf32>
    %17 = arith.maximumf %15, %16 : vector<8x512xf32>
    %18 = arith.truncf %17 : vector<8x512xf32> to vector<8x512xbf16>
    %c0_14 = arith.constant 0 : index
    %c0_15 = arith.constant 0 : index
    %c0_16 = arith.constant 0 : index
    %19 = vector.load %arg5[%c0_14, %c0_15, %c0_16] : memref<1x512x512xbf16, #tpu.memory_space<vmem>>, vector<1x512x512xbf16>
    %20 = vector.shape_cast %19 : vector<1x512x512xbf16> to vector<512x512xbf16>
    %cst_17 = arith.constant dense<0.000000e+00> : vector<8x512xf32>
    %21 = tpu.matmul %18, %20, %cst_17 {dimension_numbers = #tpu.dot_dimension_numbers<[1], [0], [0], [1], [0, 0, 1, 1], [], []>} : vector<8x512xbf16>, vector<512x512xbf16>, vector<8x512xf32> -> vector<8x512xf32>
    %22 = vector.extract_strided_slice %5 {offsets = [1, 0], sizes = [1, 512], strides = [1, 1]} : vector<3x512xf32> to vector<1x512xf32>
    %23 = vector.broadcast %22 : vector<1x512xf32> to vector<8x512xf32>
    %24 = arith.addf %21, %23 : vector<8x512xf32>
    %cst_18 = arith.constant 0.000000e+00 : f32
    %25 = vector.broadcast %cst_18 : f32 to vector<8x512xf32>
    %26 = arith.maximumf %24, %25 : vector<8x512xf32>
    %27 = arith.truncf %26 : vector<8x512xf32> to vector<8x512xbf16>
    %c0_19 = arith.constant 0 : index
    %c0_20 = arith.constant 0 : index
    %c0_21 = arith.constant 0 : index
    %28 = vector.load %arg6[%c0_19, %c0_20, %c0_21] : memref<1x512x1xbf16, #tpu.memory_space<vmem>>, vector<1x512x1xbf16>
    %29 = vector.shape_cast %28 : vector<1x512x1xbf16> to vector<512x1xbf16>
    %cst_22 = arith.constant dense<0.000000e+00> : vector<8x1xf32>
    %30 = tpu.matmul %27, %29, %cst_22 {dimension_numbers = #tpu.dot_dimension_numbers<[1], [0], [0], [1], [0, 0, 1, 1], [], []>} : vector<8x512xbf16>, vector<512x1xbf16>, vector<8x1xf32> -> vector<8x1xf32>
    %31 = vector.extract_strided_slice %5 {offsets = [2, 0], sizes = [1, 1], strides = [1, 1]} : vector<3x512xf32> to vector<1x1xf32>
    %32 = vector.broadcast %31 : vector<1x1xf32> to vector<8x1xf32>
    %33 = arith.addf %30, %32 : vector<8x1xf32>
    %c0_23 = arith.constant 0 : index
    %c0_24 = arith.constant 0 : index
    %c0_25 = arith.constant 0 : index
    %34 = vector.load %arg8[%c0_23, %c0_24, %c0_25] : memref<1x8x1xf32, #tpu.memory_space<vmem>>, vector<1x8x1xf32>
    %35 = vector.shape_cast %34 : vector<1x8x1xf32> to vector<8x1xf32>
    %36 = vector.shape_cast %33 : vector<8x1xf32> to vector<1x8x1xf32>
    tpu.vector_store %arg8[%c0_23, %c0_24, %c0_25], %36 {strides = array<i32>} : memref<1x8x1xf32, #tpu.memory_space<vmem>>, vector<1x8x1xf32>,
    return
  }
  func.func @transform_0(%arg0: i32) -> (i32, i32) {
    %c0_i32 = arith.constant 0 : i32
    %c0_i32_0 = arith.constant 0 : i32
    %c0_i32_1 = arith.constant 0 : i32
    return %c0_i32, %c0_i32_0 : i32, i32
  }
  func.func @transform_1(%arg0: i32) -> (i32, i32) {
    %c0_i32 = arith.constant 0 : i32
    %c0_i32_0 = arith.constant 0 : i32
    %c0_i32_1 = arith.constant 0 : i32
    return %c0_i32, %c0_i32_0 : i32, i32
  }
  func.func @transform_2(%arg0: i32) -> (i32, i32, i32) {
    %c0_i32 = arith.constant 0 : i32
    %c0_i32_0 = arith.constant 0 : i32
    %c0_i32_1 = arith.constant 0 : i32
    return %arg0, %c0_i32, %c0_i32_0 : i32, i32, i32
  }
  func.func @transform_3(%arg0: i32) -> (i32, i32, i32) {
    %c0_i32 = arith.constant 0 : i32
    %c0_i32_0 = arith.constant 0 : i32
    %c0_i32_1 = arith.constant 0 : i32
    return %arg0, %c0_i32, %c0_i32_0 : i32, i32, i32
  }
  func.func @transform_4(%arg0: i32) -> (i32, i32, i32) {
    %c0_i32 = arith.constant 0 : i32
    %c0_i32_0 = arith.constant 0 : i32
    %c0_i32_1 = arith.constant 0 : i32
    return %arg0, %c0_i32, %c0_i32_0 : i32, i32, i32
  }
  func.func @transform_5(%arg0: i32) -> (i32, i32, i32) {
    %c0_i32 = arith.constant 0 : i32
    %c0_i32_0 = arith.constant 0 : i32
    %c0_i32_1 = arith.constant 0 : i32
    return %arg0, %c0_i32, %c0_i32_0 : i32, i32, i32
  }
  func.func @transform_6(%arg0: i32) -> (i32, i32, i32) {
    %c0_i32 = arith.constant 0 : i32
    %c0_i32_0 = arith.constant 0 : i32
    %c0_i32_1 = arith.constant 0 : i32
    return %arg0, %c0_i32, %c0_i32_0 : i32, i32, i32
  }
  func.func @transform_7(%arg0: i32) -> (i32, i32, i32) {
    %c0_i32 = arith.constant 0 : i32
    %c0_i32_0 = arith.constant 0 : i32
    %c0_i32_1 = arith.constant 0 : i32
    return %arg0, %c0_i32, %c0_i32_0 : i32, i32, i32
  }
}

</mosaic_0001>

<llo_original>
// kernel: tpu_custom_call.1
$region0: #{tpu_custom_call.1}
  #allocation0 [shape = 'u32[]', space=smem, size = 0x4, offset = 0x4, fixed_abs, tag = 'smem constant byte address 0x4 - core index']
  #allocation1 [shape = 'u32[144,128]{1,0:T(1,128)}', space=vmem, size = 0x12000, scoped, tag = 'internal scratch']
  %s0 = inlined_call_operand.vmem [shape: f32[8,24], index: 0, kind: input, shape index: {}]
  %s1 = inlined_call_operand.vmem [shape: f32[8,7], index: 1, kind: input, shape index: {}]
  %s2 = inlined_call_operand.vmem [shape: bf16[2,24,512], index: 2, kind: input, shape index: {}]
  %s3 = inlined_call_operand.vmem [shape: bf16[2,7,512], index: 3, kind: input, shape index: {}]
  %s4 = inlined_call_operand.hbm [shape: bf16[2,512,512], index: 4, kind: input, shape index: {}]
  %s5 = inlined_call_operand.vmem [shape: bf16[2,512,1], index: 5, kind: input, shape index: {}]
  %s6 = inlined_call_operand.vmem [shape: f32[2,3,512], index: 6, kind: input, shape index: {}]
  %s7 = inlined_call_operand.vmem [shape: f32[2,8,1], index: 7, kind: output, shape index: {}]
  %s8 = sld [smem:[#allocation0]]
  $region65: #{tpu_custom_call.1} parent=0
    _
  %s10 = ssub.s32 1, %s8
  %s11 = scalar_select 0, %s10, %s8
  $region1: #{tpu_custom_call.1} parent=0
    #allocation2 [shape = 'u8[1048576]{0}', space=vmem, size = 0x100000, scoped, tag = 'input window, operand 4']
    #allocation3 [shape = 's32[2]{0}', space=sflag, size = 0x8, scoped, tag = 'scoped memory for tpu_custom_call.1']
    %12 = vsyncpa [#allocation3], 0
    %s13 = scalar_lea.sflag [#allocation3], 1
    %14 = vsyncpa %s13, 0
    loop: start=0, step=1, limit=4
    $region2: #{tpu_custom_call.1} parent=1 // loop_pre_header
      _
    $region3: #{tpu_custom_call.1} parent=1 // loop_header
      %s16 = sphi 0, %s20
      %p17 = scmp.ge.s32.totalorder %s16, 4
      %s24 = sphi 0, %s24
      %s26 = sphi 0, %s24
      %s27 = sphi 0, %s26
      %s41 = sphi 0, %s27
      %s45 = sphi 0, %s45
      %s47 = sphi 0, %s45
      %s48 = sphi 0, %s47
      %s62 = sphi 0, %s48
      %s68 = sphi 0, %s70
      %s71 = sphi 0, %s68
      %s72 = sphi 0, %s71
      %s88 = sphi 0, %s72
      %s94 = sphi 0, %s96
      %s97 = sphi 0, %s94
      %s98 = sphi 0, %s97
      %s114 = sphi 0, %s98
      %s120 = sphi 0, %s122
      %s123 = sphi 0, %s120
      %s124 = sphi 0, %s123
      %s140 = sphi 0, %s124
      %s146 = sphi 0, %s148
      %s149 = sphi 0, %s146
      %s150 = sphi 0, %s149
      %s166 = sphi 0, %s150
      %s172 = sphi 0, %s174
      %s175 = sphi 0, %s172
      %s176 = sphi 0, %s175
      %s192 = sphi 0, %s176
      %s198 = sphi 0, %s200
      %s201 = sphi 0, %s198
      %s202 = sphi 0, %s201
      %s218 = sphi 0, %s202
    $region4: #{tpu_custom_call.1} parent=1 // loop_header_branch
      %19 = sbr.rel (%p17) target = $region8
    $region5: #{tpu_custom_call.1} parent=1 // loop_body
      %s21 = ssub.s32 %s16, 1
      %s22 = ssub.s32 %s16, 2
      %s23 = sadd.s32 %s16, 1
      %s25 = sadd.s32 %s24, 1
      %p28 = scmp.eq.s32.totalorder %s16, 1
      %p29 = scmp.ne.s32.totalorder %s24, %s26
      %p30 = scmp.eq.s32.totalorder %s16, 0
      %p31 = por %p29, %p30
      %p32 = scmp.ne.s32.totalorder %s24, %s26
      %p33 = scmp.eq.s32.totalorder %s21, 1
      %p34 = por %p32, %p33
      %p35 = scmp.ne.s32.totalorder %s26, %s27
      %p36 = scmp.eq.s32.totalorder %s21, 0
      %p37 = por %p35, %p36
      %p38 = scmp.ne.s32.totalorder %s26, %s27
      %p39 = scmp.eq.s32.totalorder %s22, 1
      %p40 = por %p38, %p39
      %p42 = scmp.ne.s32.totalorder %s27, %s41
      %p43 = scmp.eq.s32.totalorder %s22, 0
      %p44 = por %p42, %p43
      %s46 = sadd.s32 %s45, 1
      %p49 = scmp.eq.s32.totalorder %s16, 1
      %p50 = scmp.ne.s32.totalorder %s45, %s47
      %p51 = scmp.eq.s32.totalorder %s16, 0
      %p52 = por %p50, %p51
      %p53 = scmp.ne.s32.totalorder %s45, %s47
      %p54 = scmp.eq.s32.totalorder %s21, 1
      %p55 = por %p53, %p54
      %p56 = scmp.ne.s32.totalorder %s47, %s48
      %p57 = scmp.eq.s32.totalorder %s21, 0
      %p58 = por %p56, %p57
      %p59 = scmp.ne.s32.totalorder %s47, %s48
      %p60 = scmp.eq.s32.totalorder %s22, 1
      %p61 = por %p59, %p60
      %p63 = scmp.ne.s32.totalorder %s48, %s62
      %p64 = scmp.eq.s32.totalorder %s22, 0
      %p65 = por %p63, %p64
      %s66 = ssub.s32 %s16, %s23
      %p67 = scmp.eq.s32.totalorder %s66, 0
      %s69 = sadd.s32 %s68, 1
      %s70 = scalar_select %p67, %s68, %s69
      %p73 = pneg %p67
      %p74 = scmp.eq.s32.totalorder %s16, 1
      %p75 = por %p73, %p74
      %p76 = scmp.ne.s32.totalorder %s68, %s71
      %p77 = scmp.eq.s32.totalorder %s16, 0
      %p78 = por %p76, %p77
      %p79 = scmp.ne.s32.totalorder %s68, %s71
      %p80 = scmp.eq.s32.totalorder %s21, 1
      %p81 = por %p79, %p80
      %p82 = scmp.ne.s32.totalorder %s71, %s72
      %p83 = scmp.eq.s32.totalorder %s21, 0
      %p84 = por %p82, %p83
      %p85 = scmp.ne.s32.totalorder %s71, %s72
      %p86 = scmp.eq.s32.totalorder %s22, 1
      %p87 = por %p85, %p86
      %p89 = scmp.ne.s32.totalorder %s72, %s88
      %p90 = scmp.eq.s32.totalorder %s22, 0
      %p91 = por %p89, %p90
      %s92 = ssub.s32 %s16, %s23
      %p93 = scmp.eq.s32.totalorder %s92, 0
      %s95 = sadd.s32 %s94, 1
      %s96 = scalar_select %p93, %s94, %s95
      %p99 = pneg %p93
      %p100 = scmp.eq.s32.totalorder %s16, 1
      %p101 = por %p99, %p100
      %p102 = scmp.ne.s32.totalorder %s94, %s97
      %p103 = scmp.eq.s32.totalorder %s16, 0
      %p104 = por %p102, %p103
      %p105 = scmp.ne.s32.totalorder %s94, %s97
      %p106 = scmp.eq.s32.totalorder %s21, 1
      %p107 = por %p105, %p106
      %p108 = scmp.ne.s32.totalorder %s97, %s98
      %p109 = scmp.eq.s32.totalorder %s21, 0
      %p110 = por %p108, %p109
      %p111 = scmp.ne.s32.totalorder %s97, %s98
      %p112 = scmp.eq.s32.totalorder %s22, 1
      %p113 = por %p111, %p112
      %p115 = scmp.ne.s32.totalorder %s98, %s114
      %p116 = scmp.eq.s32.totalorder %s22, 0
      %p117 = por %p115, %p116
      %s118 = ssub.s32 %s16, %s23
      %p119 = scmp.eq.s32.totalorder %s118, 0
      %s121 = sadd.s32 %s120, 1
      %s122 = scalar_select %p119, %s120, %s121
      %p125 = pneg %p119
      %p126 = scmp.eq.s32.totalorder %s16, 1
      %p127 = por %p125, %p126
      %p128 = scmp.ne.s32.totalorder %s120, %s123
      %p129 = scmp.eq.s32.totalorder %s16, 0
      %p130 = por %p128, %p129
      %p131 = scmp.ne.s32.totalorder %s120, %s123
      %p132 = scmp.eq.s32.totalorder %s21, 1
      %p133 = por %p131, %p132
      %p134 = scmp.ne.s32.totalorder %s123, %s124
      %p135 = scmp.eq.s32.totalorder %s21, 0
      %p136 = por %p134, %p135
      %p137 = scmp.ne.s32.totalorder %s123, %s124
      %p138 = scmp.eq.s32.totalorder %s22, 1
      %p139 = por %p137, %p138
      %p141 = scmp.ne.s32.totalorder %s124, %s140
      %p142 = scmp.eq.s32.totalorder %s22, 0
      %p143 = por %p141, %p142
      %s144 = ssub.s32 %s16, %s23
      %p145 = scmp.eq.s32.totalorder %s144, 0
      %s147 = sadd.s32 %s146, 1
      %s148 = scalar_select %p145, %s146, %s147
      %p151 = pneg %p145
      %p152 = scmp.eq.s32.totalorder %s16, 1
      %p153 = por %p151, %p152
      %p154 = scmp.ne.s32.totalorder %s146, %s149
      %p155 = scmp.eq.s32.totalorder %s16, 0
      %p156 = por %p154, %p155
      %p157 = scmp.ne.s32.totalorder %s146, %s149
      %p158 = scmp.eq.s32.totalorder %s21, 1
      %p159 = por %p157, %p158
      %p160 = scmp.ne.s32.totalorder %s149, %s150
      %p161 = scmp.eq.s32.totalorder %s21, 0
      %p162 = por %p160, %p161
      %p163 = scmp.ne.s32.totalorder %s149, %s150
      %p164 = scmp.eq.s32.totalorder %s22, 1
      %p165 = por %p163, %p164
      %p167 = scmp.ne.s32.totalorder %s150, %s166
      %p168 = scmp.eq.s32.totalorder %s22, 0
      %p169 = por %p167, %p168
      %s170 = ssub.s32 %s16, %s23
      %p171 = scmp.eq.s32.totalorder %s170, 0
      %s173 = sadd.s32 %s172, 1
      %s174 = scalar_select %p171, %s172, %s173
      %p177 = pneg %p171
      %p178 = scmp.eq.s32.totalorder %s16, 1
      %p179 = por %p177, %p178
      %p180 = scmp.ne.s32.totalorder %s172, %s175
      %p181 = scmp.eq.s32.totalorder %s16, 0
      %p182 = por %p180, %p181
      %p183 = scmp.ne.s32.totalorder %s172, %s175
      %p184 = scmp.eq.s32.totalorder %s21, 1
      %p185 = por %p183, %p184
      %p186 = scmp.ne.s32.totalorder %s175, %s176
      %p187 = scmp.eq.s32.totalorder %s21, 0
      %p188 = por %p186, %p187
      %p189 = scmp.ne.s32.totalorder %s175, %s176
      %p190 = scmp.eq.s32.totalorder %s22, 1
      %p191 = por %p189, %p190
      %p193 = scmp.ne.s32.totalorder %s176, %s192
      %p194 = scmp.eq.s32.totalorder %s22, 0
      %p195 = por %p193, %p194
      %s196 = ssub.s32 %s16, %s23
      %p197 = scmp.eq.s32.totalorder %s196, 0
      %s199 = sadd.s32 %s198, 1
      %s200 = scalar_select %p197, %s198, %s199
      %p203 = pneg %p197
      %p204 = scmp.eq.s32.totalorder %s16, 1
      %p205 = por %p203, %p204
      %p206 = scmp.ne.s32.totalorder %s198, %s201
      %p207 = scmp.eq.s32.totalorder %s16, 0
      %p208 = por %p206, %p207
      %p209 = scmp.ne.s32.totalorder %s198, %s201
      %p210 = scmp.eq.s32.totalorder %s21, 1
      %p211 = por %p209, %p210
      %p212 = scmp.ne.s32.totalorder %s201, %s202
      %p213 = scmp.eq.s32.totalorder %s21, 0
      %p214 = por %p212, %p213
      %p215 = scmp.ne.s32.totalorder %s201, %s202
      %p216 = scmp.eq.s32.totalorder %s22, 1
      %p217 = por %p215, %p216
      %p219 = scmp.ne.s32.totalorder %s202, %s218
      %p220 = scmp.eq.s32.totalorder %s22, 0
      %p221 = por %p219, %p220
      %p222 = scmp.le.s32.totalorder 1, %s16
      %p223 = scmp.lt.s32.totalorder %s16, 3
      %p224 = pnand %p222, %p223
      %p225 = pneg %p224
      // Predicated region
      $region9: #{tpu_custom_call.1} parent=5 // pred_check
        _
      $region10: #{tpu_custom_call.1} parent=5 // pred_check_branch
        %227 = sbr.rel (%p224) target = $region12
      $region11: #{tpu_custom_call.1} parent=5 // pred_region
        %s228 = ssub.s32 %s16, 1
        // Predicated region
        $region13: #{tpu_custom_call.1} parent=11 // pred_check
          %p229 = pneg %p37
        $region14: #{tpu_custom_call.1} parent=11 // pred_check_branch
          %231 = sbr.rel (%p229) target = $region16
        $region15: #{tpu_custom_call.1} parent=11 // pred_region
          _
        $region16: #{tpu_custom_call.1} parent=11 // pred_fallthru
          _
        // Predicated region
        $region17: #{tpu_custom_call.1} parent=11 // pred_check
          %p232 = pneg %p58
        $region18: #{tpu_custom_call.1} parent=11 // pred_check_branch
          %234 = sbr.rel (%p232) target = $region20
        $region19: #{tpu_custom_call.1} parent=11 // pred_region
          _
        $region20: #{tpu_custom_call.1} parent=11 // pred_fallthru
          _
      $region12: #{tpu_custom_call.1} parent=5 // pred_fallthru
        _
      %p235 = scmp.lt.s32.totalorder %s16, 2
      // Predicated region
      $region21: #{tpu_custom_call.1} parent=5 // pred_check
        %p236 = pneg %p235
      $region22: #{tpu_custom_call.1} parent=5 // pred_check_branch
        %238 = sbr.rel (%p236) target = $region24
      $region23: #{tpu_custom_call.1} parent=5 // pred_region
        // Predicated region
        $region25: #{tpu_custom_call.1} parent=23 // pred_check
          %p239 = pneg %p78
        $region26: #{tpu_custom_call.1} parent=23 // pred_check_branch
          %241 = sbr.rel (%p239) target = $region28
        $region27: #{tpu_custom_call.1} parent=23 // pred_region
          %p242 = scmp.lt.s32.totalorder %s16, 1
          %s243 = scalar_select %p242, %s16, 1
          %s244 = smul.addr %s243, 12
          %s245 = smul.addr %s244, 4
          %s246 = scalar_lea.vmem %s2, %s245
        $region28: #{tpu_custom_call.1} parent=23 // pred_fallthru
          _
        // Predicated region
        $region29: #{tpu_custom_call.1} parent=23 // pred_check
          %p247 = pneg %p104
        $region30: #{tpu_custom_call.1} parent=23 // pred_check_branch
          %249 = sbr.rel (%p247) target = $region32
        $region31: #{tpu_custom_call.1} parent=23 // pred_region
          %p250 = scmp.lt.s32.totalorder %s16, 1
          %s251 = scalar_select %p250, %s16, 1
          %s252 = smul.addr %s251, 4
          %s253 = smul.addr %s252, 4
          %s254 = scalar_lea.vmem %s3, %s253
        $region32: #{tpu_custom_call.1} parent=23 // pred_fallthru
          _
        // Predicated region
        $region33: #{tpu_custom_call.1} parent=23 // pred_check
          %p255 = pneg %p130
        $region34: #{tpu_custom_call.1} parent=23 // pred_check_branch
          %257 = sbr.rel (%p255) target = $region36
        $region35: #{tpu_custom_call.1} parent=23 // pred_region
          %s258 = sand.u32 %s120, 1
          %s259 = scalar_lea.sflag [#allocation3], %s258
          %s260 = sand.u32 %s120, 1
          %s261 = smul.addr %s260, 1024
          %s262 = scalar_lea.vmem [#allocation2], %s261
          %s264 = ssub.s32 16384, 16384
          %265 = vsyncadd %s259, %s264
          %s266 = smul.addr %s16, 256
          %s267 = smul.addr %s266, 64
          %s268 = scalar_lea.hbm %s4, %s267
          %s269 = sshll.u32 %s262, 4
          %s270 = int_to_ptr.vmem [resolvable:$true] %s269
          %275 = dma.hbm_to_vmem [thread:$0]  %s268, 16384, %s270, %s259, 256, 256, 16
        $region36: #{tpu_custom_call.1} parent=23 // pred_fallthru
          _
        // Predicated region
        $region37: #{tpu_custom_call.1} parent=23 // pred_check
          %p276 = pneg %p156
        $region38: #{tpu_custom_call.1} parent=23 // pred_check_branch
          %278 = sbr.rel (%p276) target = $region40
        $region39: #{tpu_custom_call.1} parent=23 // pred_region
          %p279 = scmp.lt.s32.totalorder %s16, 1
          %s280 = scalar_select %p279, %s16, 1
          %s281 = smul.addr %s280, 64
          %s282 = smul.addr %s281, 4
          %s283 = scalar_lea.vmem %s5, %s282
        $region40: #{tpu_custom_call.1} parent=23 // pred_fallthru
          _
        // Predicated region
        $region41: #{tpu_custom_call.1} parent=23 // pred_check
          %p284 = pneg %p182
        $region42: #{tpu_custom_call.1} parent=23 // pred_check_branch
          %286 = sbr.rel (%p284) target = $region44
        $region43: #{tpu_custom_call.1} parent=23 // pred_region
          %p287 = scmp.lt.s32.totalorder %s16, 1
          %s288 = scalar_select %p287, %s16, 1
          %s289 = smul.addr %s288, 4
          %s290 = smul.addr %s289, 4
          %s291 = scalar_lea.vmem %s6, %s290
        $region44: #{tpu_custom_call.1} parent=23 // pred_fallthru
          _
      $region24: #{tpu_custom_call.1} parent=5 // pred_fallthru
        _
      %p292 = scmp.le.s32.totalorder 1, %s16
      %p293 = scmp.lt.s32.totalorder %s16, 3
      %p294 = pnand %p292, %p293
      %p295 = pneg %p294
      // Predicated region
      $region45: #{tpu_custom_call.1} parent=5 // pred_check
        _
      $region46: #{tpu_custom_call.1} parent=5 // pred_check_branch
        %297 = sbr.rel (%p294) target = $region48
      $region47: #{tpu_custom_call.1} parent=5 // pred_region
        %s298 = ssub.s32 %s16, 1
        %s299 = sand.u32 %s123, 1
        %s300 = scalar_lea.sflag [#allocation3], %s299
        %s301 = sand.u32 %s123, 1
        %s302 = smul.addr %s301, 1024
        %s303 = scalar_lea.vmem [#allocation2], %s302
        // Predicated region
        $region49: #{tpu_custom_call.1} parent=47 // pred_check
          %p304 = pneg %p136
        $region50: #{tpu_custom_call.1} parent=47 // pred_check_branch
          %306 = sbr.rel (%p304) target = $region52
        $region51: #{tpu_custom_call.1} parent=47 // pred_region
          %307 = dma.done %s300, 16384
        $region52: #{tpu_custom_call.1} parent=47 // pred_fallthru
          _
        %p308 = pneg %p37
        %p309 = pneg %p34
        %p310 = pneg %p58
        %p311 = pneg %p55
        %p312 = scmp.lt.s32.totalorder %s21, 1
        %s313 = scalar_select %p312, %s21, 1
        %s314 = smul.addr %s313, 12
        %s315 = smul.addr %s314, 4
        %s316 = scalar_lea.vmem %s2, %s315
        %p317 = pneg %p84
        %p318 = pneg %p81
        %p319 = scmp.lt.s32.totalorder %s21, 1
        %s320 = scalar_select %p319, %s21, 1
        %s321 = smul.addr %s320, 4
        %s322 = smul.addr %s321, 4
        %s323 = scalar_lea.vmem %s3, %s322
        %p324 = pneg %p110
        %p325 = pneg %p107
        %s326 = sand.u32 %s123, 1
        %s327 = scalar_lea.sflag [#allocation3], %s326
        %s328 = sand.u32 %s123, 1
        %s329 = smul.addr %s328, 1024
        %s330 = scalar_lea.vmem [#allocation2], %s329
        %p331 = pneg %p136
        %p332 = pneg %p133
        %p333 = scmp.lt.s32.totalorder %s21, 1
        %s334 = scalar_select %p333, %s21, 1
        %s335 = smul.addr %s334, 64
        %s336 = smul.addr %s335, 4
        %s337 = scalar_lea.vmem %s5, %s336
        %p338 = pneg %p162
        %p339 = pneg %p159
        %p340 = scmp.lt.s32.totalorder %s21, 1
        %s341 = scalar_select %p340, %s21, 1
        %s342 = smul.addr %s341, 4
        %s343 = smul.addr %s342, 4
        %s344 = scalar_lea.vmem %s6, %s343
        %p345 = pneg %p188
        %p346 = pneg %p185
        %p347 = pneg %p214
        %p348 = pneg %p211
        %p349 = scmp.lt.s32.totalorder %s21, 1
        %s350 = scalar_select %p349, %s21, 1
        %s351 = smul.addr %s350, 8
        %s352 = scalar_lea.vmem %s7, %s351
        %p353 = scmp.lt.s32.totalorder %s21, 1
        %s354 = scalar_select %p353, %s21, 1
        %s355 = smul.addr %s354, 12
        %s356 = smul.addr %s355, 4
        %s357 = scalar_lea.vmem %s2, %s356
        %p358 = scmp.lt.s32.totalorder %s21, 1
        %s359 = scalar_select %p358, %s21, 1
        %s360 = smul.addr %s359, 4
        %s361 = smul.addr %s360, 4
        %s362 = scalar_lea.vmem %s3, %s361
        %p363 = scmp.lt.s32.totalorder %s21, 1
        %s364 = scalar_select %p363, %s21, 1
        %s365 = smul.addr %s364, 64
        %s366 = smul.addr %s365, 4
        %s367 = scalar_lea.vmem %s5, %s366
        %p368 = scmp.lt.s32.totalorder %s21, 1
        %s369 = scalar_select %p368, %s21, 1
        %s370 = smul.addr %s369, 4
        %s371 = smul.addr %s370, 4
        %s372 = scalar_lea.vmem %s6, %s371
        %p373 = scmp.lt.s32.totalorder %s21, 1
        %s374 = scalar_select %p373, %s21, 1
        %s375 = smul.addr %s374, 8
        %s376 = scalar_lea.vmem %s7, %s375
        %v378 = vld [vmem:[%s0] sm:$0xff]
        %v379 = vpack.c.bf16 %v378, %v378
        %v380 = vld [vmem:[%s1] sm:$0xff]
        %v381 = vpack.c.bf16 %v380, %v380
        %v382 = vld [vmem:[%s372] sm:$0x77]
        %v383 = vld [vmem:[%s372 + $0x8] sm:$0x77]
        %v384 = vld [vmem:[%s357] sm:$0xff]
        %v385 = vld [vmem:[%s357 + $0x8] sm:$0xff]
        %v386 = vld [vmem:[%s357 + $0x10] sm:$0xff]
        %v387 = vld [vmem:[%s357 + $0x18] sm:$0xff]
        %v388 = vld [vmem:[%s357 + $0x20] sm:$0xff]
        %v389 = vld [vmem:[%s357 + $0x28] sm:$0xff]
        %v390 = vld [vmem:[%s362] sm:$0xff]
        %v391 = vld [vmem:[%s362 + $0x8] sm:$0xff]
        %v394 = vunpack.c.l.b16 %v390
        %v395 = vunpack.c.h.b16 %v390
        %v396 = vunpack.c.l.b16 %v391
        %v397 = vunpack.c.h.b16 %v391
        %v398 = vpack.c.b16 %v394, %v394
        %v399 = vpack.c.b16 %v395, %v395
        %v400 = vpack.c.b16 %v396, %v396
        %v401 = vpack.c.b16 %v397, %v397
        %vm402 = vcmask 56320
        %v404 = vsel %vm402, %v381, 0
        %vm406 = vcmask 1042432
        %vm407 = vcmask 1043456
        %v408 = vsel %vm406, 4294967295, 65535
        %v409 = vsel %vm407, %v408, 0
        %v411 = vand.u32 %v398, %v409
        %v414 = vand.u32 %v399, %v409
        %v417 = vand.u32 %v400, %v409
        %v420 = vand.u32 %v401, %v409
        %422 = vmatprep.subr.bf16.mxu0 0
        %423 = vmatpush1.bf16.msra.mxu0 0
        %424 = vmatprep.subr.bf16.mxu0 0
        %425 = vmatpush1.bf16.msra.mxu0 0
        %426 = vmatprep.subr.bf16.mxu0 0
        %427 = vmatpush1.bf16.msra.mxu0 0
        %428 = vmatprep.subr.bf16.mxu0 0
        %429 = vmatpush1.bf16.msra.mxu0 0
        %430 = vmatprep.subr.bf16.mxu0 0
        %431 = vmatpush1.bf16.msra.mxu0 0
        %432 = vmatprep.subr.bf16.mxu0 0
        %433 = vmatpush1.bf16.msra.mxu0 0
        %434 = vmatprep.subr.bf16.mxu0 0
        %435 = vmatpush1.bf16.msra.mxu0 0
        %436 = vmatprep.subr.bf16.mxu0 %v414
        %437 = vmatpush1.bf16.msra.mxu0 %v411
        %438 = vmatprep.subr.bf16.mxu0 0
        %439 = vmatpush2.bf16.msra.mxu0 0
        %440 = vmatprep.subr.bf16.mxu0 0
        %441 = vmatpush2.bf16.msra.mxu0 0
        %442 = vmatprep.subr.bf16.mxu0 0
        %443 = vmatpush2.bf16.msra.mxu0 0
        %444 = vmatprep.subr.bf16.mxu0 0
        %445 = vmatpush2.bf16.msra.mxu0 0
        %446 = vmatprep.subr.bf16.mxu0 0
        %447 = vmatpush2.bf16.msra.mxu0 0
        %448 = vmatprep.subr.bf16.mxu0 0
        %449 = vmatpush2.bf16.msra.mxu0 0
        %450 = vmatprep.subr.bf16.mxu0 0
        %451 = vmatpush2.bf16.msra.mxu0 0
        %452 = vmatprep.subr.bf16.mxu0 0
        %453 = vmatpush2.bf16.msra.mxu0 0
        %454 = vmatprep.mubr.bf16.mxu0 0
        %455 = vmatmul.mubr.bf16.gmra.mxu0 %v404
        %v456 = vpop.f32.mrf.mxu0
        %v457 = vadd.f32 0.0, %v456
        %v458 = vpop.f32.mrf.mxu0
        %v459 = vadd.f32 0.0, %v458
        %v460 = vpop.f32.mrf.mxu0
        %v461 = vpop.f32.mrf.mxu0
        %462 = vdwg.mxu0
        %463 = vmatprep.subr.bf16.mxu0 0
        %464 = vmatpush1.bf16.msra.mxu0 0
        %465 = vmatprep.subr.bf16.mxu0 0
        %466 = vmatpush1.bf16.msra.mxu0 0
        %467 = vmatprep.subr.bf16.mxu0 0
        %468 = vmatpush1.bf16.msra.mxu0 0
        %469 = vmatprep.subr.bf16.mxu0 0
        %470 = vmatpush1.bf16.msra.mxu0 0
        %471 = vmatprep.subr.bf16.mxu0 0
        %472 = vmatpush1.bf16.msra.mxu0 0
        %473 = vmatprep.subr.bf16.mxu0 0
        %474 = vmatpush1.bf16.msra.mxu0 0
        %475 = vmatprep.subr.bf16.mxu0 0
        %476 = vmatpush1.bf16.msra.mxu0 0
        %477 = vmatprep.subr.bf16.mxu0 %v420
        %478 = vmatpush1.bf16.msra.mxu0 %v417
        %479 = vmatprep.subr.bf16.mxu0 0
        %480 = vmatpush2.bf16.msra.mxu0 0
        %481 = vmatprep.subr.bf16.mxu0 0
        %482 = vmatpush2.bf16.msra.mxu0 0
        %483 = vmatprep.subr.bf16.mxu0 0
        %484 = vmatpush2.bf16.msra.mxu0 0
        %485 = vmatprep.subr.bf16.mxu0 0
        %486 = vmatpush2.bf16.msra.mxu0 0
        %487 = vmatprep.subr.bf16.mxu0 0
        %488 = vmatpush2.bf16.msra.mxu0 0
        %489 = vmatprep.subr.bf16.mxu0 0
        %490 = vmatpush2.bf16.msra.mxu0 0
        %491 = vmatprep.subr.bf16.mxu0 0
        %492 = vmatpush2.bf16.msra.mxu0 0
        %493 = vmatprep.subr.bf16.mxu0 0
        %494 = vmatpush2.bf16.msra.mxu0 0
        %495 = vmatprep.mubr.bf16.mxu0 0
        %496 = vmatmul.mubr.bf16.gmra.mxu0 %v404
        %v497 = vpop.f32.mrf.mxu0
        %v498 = vadd.f32 0.0, %v497
        %v499 = vpop.f32.mrf.mxu0
        %v500 = vadd.f32 0.0, %v499
        %v501 = vpop.f32.mrf.mxu0
        %v502 = vpop.f32.mrf.mxu0
        %503 = vdwg.mxu0
        %v510 = vunpack.c.l.b16 %v384
        %v511 = vunpack.c.h.b16 %v384
        %v512 = vunpack.c.l.b16 %v385
        %v513 = vunpack.c.h.b16 %v385
        %v514 = vunpack.c.l.b16 %v386
        %v515 = vunpack.c.h.b16 %v386
        %v516 = vunpack.c.l.b16 %v387
        %v517 = vunpack.c.h.b16 %v387
        %v518 = vunpack.c.l.b16 %v388
        %v519 = vunpack.c.h.b16 %v388
        %v520 = vunpack.c.l.b16 %v389
        %v521 = vunpack.c.h.b16 %v389
        %v522 = vpack.c.b16 %v514, %v510
        %v523 = vpack.c.b16 %v515, %v511
        %v524 = vpack.c.b16 %v516, %v512
        %v525 = vpack.c.b16 %v517, %v513
        %v526 = vpack.c.b16 %v518, %v518
        %v527 = vpack.c.b16 %v519, %v519
        %v528 = vpack.c.b16 %v520, %v520
        %v529 = vpack.c.b16 %v521, %v521
        %vm534 = vcmask 195584
        %v536 = vsel %vm534, %v379, 0
        %v539 = vsel %vm407, %v526, 0
        %v542 = vsel %vm407, %v527, 0
        %v545 = vsel %vm407, %v528, 0
        %v548 = vsel %vm407, %v529, 0
        %550 = vmatprep.subr.bf16.mxu0 0
        %551 = vmatpush1.bf16.msra.mxu0 0
        %552 = vmatprep.subr.bf16.mxu0 0
        %553 = vmatpush1.bf16.msra.mxu0 0
        %554 = vmatprep.subr.bf16.mxu0 0
        %555 = vmatpush1.bf16.msra.mxu0 0
        %556 = vmatprep.subr.bf16.mxu0 0
        %557 = vmatpush1.bf16.msra.mxu0 0
        %558 = vmatprep.subr.bf16.mxu0 0
        %559 = vmatpush1.bf16.msra.mxu0 0
        %560 = vmatprep.subr.bf16.mxu0 0
        %561 = vmatpush1.bf16.msra.mxu0 0
        %562 = vmatprep.subr.bf16.mxu0 %v542
        %563 = vmatpush1.bf16.msra.mxu0 %v539
        %564 = vmatprep.subr.bf16.mxu0 %v523
        %565 = vmatpush1.bf16.msra.mxu0 %v522
        %566 = vmatprep.subr.bf16.mxu0 0
        %567 = vmatpush2.bf16.msra.mxu0 0
        %568 = vmatprep.subr.bf16.mxu0 0
        %569 = vmatpush2.bf16.msra.mxu0 0
        %570 = vmatprep.subr.bf16.mxu0 0
        %571 = vmatpush2.bf16.msra.mxu0 0
        %572 = vmatprep.subr.bf16.mxu0 0
        %573 = vmatpush2.bf16.msra.mxu0 0
        %574 = vmatprep.subr.bf16.mxu0 0
        %575 = vmatpush2.bf16.msra.mxu0 0
        %576 = vmatprep.subr.bf16.mxu0 0
        %577 = vmatpush2.bf16.msra.mxu0 0
        %578 = vmatprep.subr.bf16.mxu0 0
        %579 = vmatpush2.bf16.msra.mxu0 0
        %580 = vmatprep.subr.bf16.mxu0 0
        %581 = vmatpush2.bf16.msra.mxu0 0
        %582 = vmatprep.mubr.bf16.mxu0 0
        %583 = vmatmul.mubr.bf16.gmra.mxu0 %v536
        %v584 = vpop.f32.mrf.mxu0
        %v585 = vadd.f32 %v457, %v584
        %v586 = vpop.f32.mrf.mxu0
        %v587 = vadd.f32 %v459, %v586
        %v588 = vpop.f32.mrf.mxu0
        %v589 = vpop.f32.mrf.mxu0
        %590 = vdwg.mxu0
        %591 = vmatprep.subr.bf16.mxu0 0
        %592 = vmatpush1.bf16.msra.mxu0 0
        %593 = vmatprep.subr.bf16.mxu0 0
        %594 = vmatpush1.bf16.msra.mxu0 0
        %595 = vmatprep.subr.bf16.mxu0 0
        %596 = vmatpush1.bf16.msra.mxu0 0
        %597 = vmatprep.subr.bf16.mxu0 0
        %598 = vmatpush1.bf16.msra.mxu0 0
        %599 = vmatprep.subr.bf16.mxu0 0
        %600 = vmatpush1.bf16.msra.mxu0 0
        %601 = vmatprep.subr.bf16.mxu0 0
        %602 = vmatpush1.bf16.msra.mxu0 0
        %603 = vmatprep.subr.bf16.mxu0 %v548
        %604 = vmatpush1.bf16.msra.mxu0 %v545
        %605 = vmatprep.subr.bf16.mxu0 %v525
        %606 = vmatpush1.bf16.msra.mxu0 %v524
        %607 = vmatprep.subr.bf16.mxu0 0
        %608 = vmatpush2.bf16.msra.mxu0 0
        %609 = vmatprep.subr.bf16.mxu0 0
        %610 = vmatpush2.bf16.msra.mxu0 0
        %611 = vmatprep.subr.bf16.mxu0 0
        %612 = vmatpush2.bf16.msra.mxu0 0
        %613 = vmatprep.subr.bf16.mxu0 0
        %614 = vmatpush2.bf16.msra.mxu0 0
        %615 = vmatprep.subr.bf16.mxu0 0
        %616 = vmatpush2.bf16.msra.mxu0 0
        %617 = vmatprep.subr.bf16.mxu0 0
        %618 = vmatpush2.bf16.msra.mxu0 0
        %619 = vmatprep.subr.bf16.mxu0 0
        %620 = vmatpush2.bf16.msra.mxu0 0
        %621 = vmatprep.subr.bf16.mxu0 0
        %622 = vmatpush2.bf16.msra.mxu0 0
        %623 = vmatprep.mubr.bf16.mxu0 0
        %624 = vmatmul.mubr.bf16.gmra.mxu0 %v536
        %v625 = vpop.f32.mrf.mxu0
        %v626 = vadd.f32 %v498, %v625
        %v627 = vpop.f32.mrf.mxu0
        %v628 = vadd.f32 %v500, %v627
        %v629 = vpop.f32.mrf.mxu0
        %v630 = vpop.f32.mrf.mxu0
        %631 = vdwg.mxu0
        %v634 = vlaneseq
        %v635 = vshrl.u32 %v634, 7
        %v636 = vsub.s32 0, %v635
        %v637 = vrot.slane %v382, %v636
        %v638 = vlaneseq
        %v639 = vshrl.u32 %v638, 7
        %v640 = vsub.s32 4, %v639
        %v641 = vrot.slane %v382, %v640
        %v642 = vlaneseq
        %v643 = vshrl.u32 %v642, 7
        %v644 = vsub.s32 0, %v643
        %v645 = vrot.slane %v383, %v644
        %v646 = vlaneseq
        %v647 = vshrl.u32 %v646, 7
        %v648 = vsub.s32 4, %v647
        %v649 = vrot.slane %v383, %v648
        %v654 = vlaneseq
        %v655 = vshrl.u32 %v654, 7
        %v656 = vsub.s32 0, %v655
        %v657 = vrot.slane %v637, %v656
        %v658 = vlaneseq
        %v659 = vshrl.u32 %v658, 7
        %v660 = vsub.s32 0, %v659
        %v661 = vrot.slane %v641, %v660
        %v662 = vlaneseq
        %v663 = vshrl.u32 %v662, 7
        %v664 = vsub.s32 0, %v663
        %v665 = vrot.slane %v645, %v664
        %v666 = vlaneseq
        %v667 = vshrl.u32 %v666, 7
        %v668 = vsub.s32 0, %v667
        %v669 = vrot.slane %v649, %v668
        %v670 = vadd.f32 %v585, %v657
        %v671 = vadd.f32 %v587, %v661
        %v672 = vadd.f32 %v626, %v665
        %v673 = vadd.f32 %v628, %v669
        %v674 = vmax.f32 %v670, 0.0
        %v675 = vmax.f32 %v671, 0.0
        %v676 = vmax.f32 %v672, 0.0
        %v677 = vmax.f32 %v673, 0.0
        %v678 = vpack.c.bf16 %v674, %v674
        %v679 = vpack.c.bf16 %v675, %v675
        %v680 = vpack.c.bf16 %v676, %v676
        %v681 = vpack.c.bf16 %v677, %v677
        %v682 = vld [vmem:[%s303] sm:$0xff]
        %v683 = vld [vmem:[%s303 + $0x8] sm:$0xff]
        %v684 = vld [vmem:[%s303 + $0x10] sm:$0xff]
        %v685 = vld [vmem:[%s303 + $0x18] sm:$0xff]
        %v686 = vld [vmem:[%s303 + $0x20] sm:$0xff]
        %v687 = vld [vmem:[%s303 + $0x28] sm:$0xff]
        %v688 = vld [vmem:[%s303 + $0x30] sm:$0xff]
        %v689 = vld [vmem:[%s303 + $0x38] sm:$0xff]
        %v690 = vld [vmem:[%s303 + $0x40] sm:$0xff]
        %v691 = vld [vmem:[%s303 + $0x48] sm:$0xff]
        %v692 = vld [vmem:[%s303 + $0x50] sm:$0xff]
        %v693 = vld [vmem:[%s303 + $0x58] sm:$0xff]
        %v694 = vld [vmem:[%s303 + $0x60] sm:$0xff]
        %v695 = vld [vmem:[%s303 + $0x68] sm:$0xff]
        %v696 = vld [vmem:[%s303 + $0x70] sm:$0xff]
        %v697 = vld [vmem:[%s303 + $0x78] sm:$0xff]
        %v698 = vld [vmem:[%s303 + $0x80] sm:$0xff]
        %v699 = vld [vmem:[%s303 + $0x88] sm:$0xff]
        %v700 = vld [vmem:[%s303 + $0x90] sm:$0xff]
        %v701 = vld [vmem:[%s303 + $0x98] sm:$0xff]
        %v702 = vld [vmem:[%s303 + $0xa0] sm:$0xff]
        %v703 = vld [vmem:[%s303 + $0xa8] sm:$0xff]
        %v704 = vld [vmem:[%s303 + $0xb0] sm:$0xff]
        %v705 = vld [vmem:[%s303 + $0xb8] sm:$0xff]
        %v706 = vld [vmem:[%s303 + $0xc0] sm:$0xff]
        %v707 = vld [vmem:[%s303 + $0xc8] sm:$0xff]
        %v708 = vld [vmem:[%s303 + $0xd0] sm:$0xff]
        %v709 = vld [vmem:[%s303 + $0xd8] sm:$0xff]
        %v710 = vld [vmem:[%s303 + $0xe0] sm:$0xff]
        %v711 = vld [vmem:[%s303 + $0xe8] sm:$0xff]
        %v712 = vld [vmem:[%s303 + $0xf0] sm:$0xff]
        %v713 = vld [vmem:[%s303 + $0xf8] sm:$0xff]
        %v714 = vld [vmem:[%s303 + $0x100] sm:$0xff]
        %v715 = vld [vmem:[%s303 + $0x108] sm:$0xff]
        %v716 = vld [vmem:[%s303 + $0x110] sm:$0xff]
        %v717 = vld [vmem:[%s303 + $0x118] sm:$0xff]
        %v718 = vld [vmem:[%s303 + $0x120] sm:$0xff]
        %v719 = vld [vmem:[%s303 + $0x128] sm:$0xff]
        %v720 = vld [vmem:[%s303 + $0x130] sm:$0xff]
        %v721 = vld [vmem:[%s303 + $0x138] sm:$0xff]
        %v722 = vld [vmem:[%s303 + $0x140] sm:$0xff]
        %v723 = vld [vmem:[%s303 + $0x148] sm:$0xff]
        %v724 = vld [vmem:[%s303 + $0x150] sm:$0xff]
        %v725 = vld [vmem:[%s303 + $0x158] sm:$0xff]
        %v726 = vld [vmem:[%s303 + $0x160] sm:$0xff]
        %v727 = vld [vmem:[%s303 + $0x168] sm:$0xff]
        %v728 = vld [vmem:[%s303 + $0x170] sm:$0xff]
        %v729 = vld [vmem:[%s303 + $0x178] sm:$0xff]
        %v730 = vld [vmem:[%s303 + $0x180] sm:$0xff]
        %v731 = vld [vmem:[%s303 + $0x188] sm:$0xff]
        %v732 = vld [vmem:[%s303 + $0x190] sm:$0xff]
        %v733 = vld [vmem:[%s303 + $0x198] sm:$0xff]
        %v734 = vld [vmem:[%s303 + $0x1a0] sm:$0xff]
        %v735 = vld [vmem:[%s303 + $0x1a8] sm:$0xff]
        %v736 = vld [vmem:[%s303 + $0x1b0] sm:$0xff]
        %v737 = vld [vmem:[%s303 + $0x1b8] sm:$0xff]
        %v738 = vld [vmem:[%s303 + $0x1c0] sm:$0xff]
        %v739 = vld [vmem:[%s303 + $0x1c8] sm:$0xff]
        %v740 = vld [vmem:[%s303 + $0x1d0] sm:$0xff]
        %v741 = vld [vmem:[%s303 + $0x1d8] sm:$0xff]
        %v742 = vld [vmem:[%s303 + $0x1e0] sm:$0xff]
        %v743 = vld [vmem:[%s303 + $0x1e8] sm:$0xff]
        %v744 = vld [vmem:[%s303 + $0x1f0] sm:$0xff]
        %v745 = vld [vmem:[%s303 + $0x1f8] sm:$0xff]
        %v746 = vld [vmem:[%s303 + $0x200] sm:$0xff]
        %v747 = vld [vmem:[%s303 + $0x208] sm:$0xff]
        %v748 = vld [vmem:[%s303 + $0x210] sm:$0xff]
        %v749 = vld [vmem:[%s303 + $0x218] sm:$0xff]
        %v750 = vld [vmem:[%s303 + $0x220] sm:$0xff]
        %v751 = vld [vmem:[%s303 + $0x228] sm:$0xff]
        %v752 = vld [vmem:[%s303 + $0x230] sm:$0xff]
        %v753 = vld [vmem:[%s303 + $0x238] sm:$0xff]
        %v754 = vld [vmem:[%s303 + $0x240] sm:$0xff]
        %v755 = vld [vmem:[%s303 + $0x248] sm:$0xff]
        %v756 = vld [vmem:[%s303 + $0x250] sm:$0xff]
        %v757 = vld [vmem:[%s303 + $0x258] sm:$0xff]
        %v758 = vld [vmem:[%s303 + $0x260] sm:$0xff]
        %v759 = vld [vmem:[%s303 + $0x268] sm:$0xff]
        %v760 = vld [vmem:[%s303 + $0x270] sm:$0xff]
        %v761 = vld [vmem:[%s303 + $0x278] sm:$0xff]
        %v762 = vld [vmem:[%s303 + $0x280] sm:$0xff]
        %v763 = vld [vmem:[%s303 + $0x288] sm:$0xff]
        %v764 = vld [vmem:[%s303 + $0x290] sm:$0xff]
        %v765 = vld [vmem:[%s303 + $0x298] sm:$0xff]
        %v766 = vld [vmem:[%s303 + $0x2a0] sm:$0xff]
        %v767 = vld [vmem:[%s303 + $0x2a8] sm:$0xff]
        %v768 = vld [vmem:[%s303 + $0x2b0] sm:$0xff]
        %v769 = vld [vmem:[%s303 + $0x2b8] sm:$0xff]
        %v770 = vld [vmem:[%s303 + $0x2c0] sm:$0xff]
        %v771 = vld [vmem:[%s303 + $0x2c8] sm:$0xff]
        %v772 = vld [vmem:[%s303 + $0x2d0] sm:$0xff]
        %v773 = vld [vmem:[%s303 + $0x2d8] sm:$0xff]
        %v774 = vld [vmem:[%s303 + $0x2e0] sm:$0xff]
        %v775 = vld [vmem:[%s303 + $0x2e8] sm:$0xff]
        %v776 = vld [vmem:[%s303 + $0x2f0] sm:$0xff]
        %v777 = vld [vmem:[%s303 + $0x2f8] sm:$0xff]
        %v778 = vld [vmem:[%s303 + $0x300] sm:$0xff]
        %v779 = vld [vmem:[%s303 + $0x308] sm:$0xff]
        %v780 = vld [vmem:[%s303 + $0x310] sm:$0xff]
        %v781 = vld [vmem:[%s303 + $0x318] sm:$0xff]
        %v782 = vld [vmem:[%s303 + $0x320] sm:$0xff]
        %v783 = vld [vmem:[%s303 + $0x328] sm:$0xff]
        %v784 = vld [vmem:[%s303 + $0x330] sm:$0xff]
        %v785 = vld [vmem:[%s303 + $0x338] sm:$0xff]
        %v786 = vld [vmem:[%s303 + $0x340] sm:$0xff]
        %v787 = vld [vmem:[%s303 + $0x348] sm:$0xff]
        %v788 = vld [vmem:[%s303 + $0x350] sm:$0xff]
        %v789 = vld [vmem:[%s303 + $0x358] sm:$0xff]
        %v790 = vld [vmem:[%s303 + $0x360] sm:$0xff]
        %v791 = vld [vmem:[%s303 + $0x368] sm:$0xff]
        %v792 = vld [vmem:[%s303 + $0x370] sm:$0xff]
        %v793 = vld [vmem:[%s303 + $0x378] sm:$0xff]
        %v794 = vld [vmem:[%s303 + $0x380] sm:$0xff]
        %v795 = vld [vmem:[%s303 + $0x388] sm:$0xff]
        %v796 = vld [vmem:[%s303 + $0x390] sm:$0xff]
        %v797 = vld [vmem:[%s303 + $0x398] sm:$0xff]
        %v798 = vld [vmem:[%s303 + $0x3a0] sm:$0xff]
        %v799 = vld [vmem:[%s303 + $0x3a8] sm:$0xff]
        %v800 = vld [vmem:[%s303 + $0x3b0] sm:$0xff]
        %v801 = vld [vmem:[%s303 + $0x3b8] sm:$0xff]
        %v802 = vld [vmem:[%s303 + $0x3c0] sm:$0xff]
        %v803 = vld [vmem:[%s303 + $0x3c8] sm:$0xff]
        %v804 = vld [vmem:[%s303 + $0x3d0] sm:$0xff]
        %v805 = vld [vmem:[%s303 + $0x3d8] sm:$0xff]
        %v806 = vld [vmem:[%s303 + $0x3e0] sm:$0xff]
        %v807 = vld [vmem:[%s303 + $0x3e8] sm:$0xff]
        %v808 = vld [vmem:[%s303 + $0x3f0] sm:$0xff]
        %v809 = vld [vmem:[%s303 + $0x3f8] sm:$0xff]
        %v810 = vlaneseq
        %v811 = vshrl.u32 %v810, 7
        %v812 = vsub.s32 1, %v811
        %v813 = vrot.slane %v382, %v812
        %v814 = vlaneseq
        %v815 = vshrl.u32 %v814, 7
        %v816 = vsub.s32 5, %v815
        %v817 = vrot.slane %v382, %v816
        %v818 = vlaneseq
        %v819 = vshrl.u32 %v818, 7
        %v820 = vsub.s32 1, %v819
        %v821 = vrot.slane %v383, %v820
        %v822 = vlaneseq
        %v823 = vshrl.u32 %v822, 7
        %v824 = vsub.s32 5, %v823
        %v825 = vrot.slane %v383, %v824
        %v830 = vlaneseq
        %v831 = vshrl.u32 %v830, 7
        %v832 = vsub.s32 1, %v831
        %v833 = vrot.slane %v813, %v832
        %v834 = vlaneseq
        %v835 = vshrl.u32 %v834, 7
        %v836 = vsub.s32 1, %v835
        %v837 = vrot.slane %v817, %v836
        %v838 = vlaneseq
        %v839 = vshrl.u32 %v838, 7
        %v840 = vsub.s32 1, %v839
        %v841 = vrot.slane %v821, %v840
        %v842 = vlaneseq
        %v843 = vshrl.u32 %v842, 7
        %v844 = vsub.s32 1, %v843
        %v845 = vrot.slane %v825, %v844
        %v974 = vunpack.c.l.b16 %v682
        %v975 = vunpack.c.h.b16 %v682
        %v976 = vunpack.c.l.b16 %v683
        %v977 = vunpack.c.h.b16 %v683
        %v978 = vunpack.c.l.b16 %v684
        %v979 = vunpack.c.h.b16 %v684
        %v980 = vunpack.c.l.b16 %v685
        %v981 = vunpack.c.h.b16 %v685
        %v982 = vunpack.c.l.b16 %v686
        %v983 = vunpack.c.h.b16 %v686
        %v984 = vunpack.c.l.b16 %v687
        %v985 = vunpack.c.h.b16 %v687
        %v986 = vunpack.c.l.b16 %v688
        %v987 = vunpack.c.h.b16 %v688
        %v988 = vunpack.c.l.b16 %v689
        %v989 = vunpack.c.h.b16 %v689
        %v990 = vunpack.c.l.b16 %v690
        %v991 = vunpack.c.h.b16 %v690
        %v992 = vunpack.c.l.b16 %v691
        %v993 = vunpack.c.h.b16 %v691
        %v994 = vunpack.c.l.b16 %v692
        %v995 = vunpack.c.h.b16 %v692
        %v996 = vunpack.c.l.b16 %v693
        %v997 = vunpack.c.h.b16 %v693
        %v998 = vunpack.c.l.b16 %v694
        %v999 = vunpack.c.h.b16 %v694
        %v1000 = vunpack.c.l.b16 %v695
        %v1001 = vunpack.c.h.b16 %v695
        %v1002 = vunpack.c.l.b16 %v696
        %v1003 = vunpack.c.h.b16 %v696
        %v1004 = vunpack.c.l.b16 %v697
        %v1005 = vunpack.c.h.b16 %v697
        %v1006 = vunpack.c.l.b16 %v698
        %v1007 = vunpack.c.h.b16 %v698
        %v1008 = vunpack.c.l.b16 %v699
        %v1009 = vunpack.c.h.b16 %v699
        %v1010 = vunpack.c.l.b16 %v700
        %v1011 = vunpack.c.h.b16 %v700
        %v1012 = vunpack.c.l.b16 %v701
        %v1013 = vunpack.c.h.b16 %v701
        %v1014 = vunpack.c.l.b16 %v702
        %v1015 = vunpack.c.h.b16 %v702
        %v1016 = vunpack.c.l.b16 %v703
        %v1017 = vunpack.c.h.b16 %v703
        %v1018 = vunpack.c.l.b16 %v704
        %v1019 = vunpack.c.h.b16 %v704
        %v1020 = vunpack.c.l.b16 %v705
        %v1021 = vunpack.c.h.b16 %v705
        %v1022 = vunpack.c.l.b16 %v706
        %v1023 = vunpack.c.h.b16 %v706
        %v1024 = vunpack.c.l.b16 %v707
        %v1025 = vunpack.c.h.b16 %v707
        %v1026 = vunpack.c.l.b16 %v708
        %v1027 = vunpack.c.h.b16 %v708
        %v1028 = vunpack.c.l.b16 %v709
        %v1029 = vunpack.c.h.b16 %v709
        %v1030 = vunpack.c.l.b16 %v710
        %v1031 = vunpack.c.h.b16 %v710
        %v1032 = vunpack.c.l.b16 %v711
        %v1033 = vunpack.c.h.b16 %v711
        %v1034 = vunpack.c.l.b16 %v712
        %v1035 = vunpack.c.h.b16 %v712
        %v1036 = vunpack.c.l.b16 %v713
        %v1037 = vunpack.c.h.b16 %v713
        %v1038 = vunpack.c.l.b16 %v714
        %v1039 = vunpack.c.h.b16 %v714
        %v1040 = vunpack.c.l.b16 %v715
        %v1041 = vunpack.c.h.b16 %v715
        %v1042 = vunpack.c.l.b16 %v716
        %v1043 = vunpack.c.h.b16 %v716
        %v1044 = vunpack.c.l.b16 %v717
        %v1045 = vunpack.c.h.b16 %v717
        %v1046 = vunpack.c.l.b16 %v718
        %v1047 = vunpack.c.h.b16 %v718
        %v1048 = vunpack.c.l.b16 %v719
        %v1049 = vunpack.c.h.b16 %v719
        %v1050 = vunpack.c.l.b16 %v720
        %v1051 = vunpack.c.h.b16 %v720
        %v1052 = vunpack.c.l.b16 %v721
        %v1053 = vunpack.c.h.b16 %v721
        %v1054 = vunpack.c.l.b16 %v722
        %v1055 = vunpack.c.h.b16 %v722
        %v1056 = vunpack.c.l.b16 %v723
        %v1057 = vunpack.c.h.b16 %v723
        %v1058 = vunpack.c.l.b16 %v724
        %v1059 = vunpack.c.h.b16 %v724
        %v1060 = vunpack.c.l.b16 %v725
        %v1061 = vunpack.c.h.b16 %v725
        %v1062 = vunpack.c.l.b16 %v726
        %v1063 = vunpack.c.h.b16 %v726
        %v1064 = vunpack.c.l.b16 %v727
        %v1065 = vunpack.c.h.b16 %v727
        %v1066 = vunpack.c.l.b16 %v728
        %v1067 = vunpack.c.h.b16 %v728
        %v1068 = vunpack.c.l.b16 %v729
        %v1069 = vunpack.c.h.b16 %v729
        %v1070 = vunpack.c.l.b16 %v730
        %v1071 = vunpack.c.h.b16 %v730
        %v1072 = vunpack.c.l.b16 %v731
        %v1073 = vunpack.c.h.b16 %v731
        %v1074 = vunpack.c.l.b16 %v732
        %v1075 = vunpack.c.h.b16 %v732
        %v1076 = vunpack.c.l.b16 %v733
        %v1077 = vunpack.c.h.b16 %v733
        %v1078 = vunpack.c.l.b16 %v734
        %v1079 = vunpack.c.h.b16 %v734
        %v1080 = vunpack.c.l.b16 %v735
        %v1081 = vunpack.c.h.b16 %v735
        %v1082 = vunpack.c.l.b16 %v736
        %v1083 = vunpack.c.h.b16 %v736
        %v1084 = vunpack.c.l.b16 %v737
        %v1085 = vunpack.c.h.b16 %v737
        %v1086 = vunpack.c.l.b16 %v738
        %v1087 = vunpack.c.h.b16 %v738
        %v1088 = vunpack.c.l.b16 %v739
        %v1089 = vunpack.c.h.b16 %v739
        %v1090 = vunpack.c.l.b16 %v740
        %v1091 = vunpack.c.h.b16 %v740
        %v1092 = vunpack.c.l.b16 %v741
        %v1093 = vunpack.c.h.b16 %v741
        %v1094 = vunpack.c.l.b16 %v742
        %v1095 = vunpack.c.h.b16 %v742
        %v1096 = vunpack.c.l.b16 %v743
        %v1097 = vunpack.c.h.b16 %v743
        %v1098 = vunpack.c.l.b16 %v744
        %v1099 = vunpack.c.h.b16 %v744
        %v1100 = vunpack.c.l.b16 %v745
        %v1101 = vunpack.c.h.b16 %v745
        %v1102 = vunpack.c.l.b16 %v746
        %v1103 = vunpack.c.h.b16 %v746
        %v1104 = vunpack.c.l.b16 %v747
        %v1105 = vunpack.c.h.b16 %v747
        %v1106 = vunpack.c.l.b16 %v748
        %v1107 = vunpack.c.h.b16 %v748
        %v1108 = vunpack.c.l.b16 %v749
        %v1109 = vunpack.c.h.b16 %v749
        %v1110 = vunpack.c.l.b16 %v750
        %v1111 = vunpack.c.h.b16 %v750
        %v1112 = vunpack.c.l.b16 %v751
        %v1113 = vunpack.c.h.b16 %v751
        %v1114 = vunpack.c.l.b16 %v752
        %v1115 = vunpack.c.h.b16 %v752
        %v1116 = vunpack.c.l.b16 %v753
        %v1117 = vunpack.c.h.b16 %v753
        %v1118 = vunpack.c.l.b16 %v754
        %v1119 = vunpack.c.h.b16 %v754
        %v1120 = vunpack.c.l.b16 %v755
        %v1121 = vunpack.c.h.b16 %v755
        %v1122 = vunpack.c.l.b16 %v756
        %v1123 = vunpack.c.h.b16 %v756
        %v1124 = vunpack.c.l.b16 %v757
        %v1125 = vunpack.c.h.b16 %v757
        %v1126 = vunpack.c.l.b16 %v758
        %v1127 = vunpack.c.h.b16 %v758
        %v1128 = vunpack.c.l.b16 %v759
        %v1129 = vunpack.c.h.b16 %v759
        %v1130 = vunpack.c.l.b16 %v760
        %v1131 = vunpack.c.h.b16 %v760
        %v1132 = vunpack.c.l.b16 %v761
        %v1133 = vunpack.c.h.b16 %v761
        %v1134 = vunpack.c.l.b16 %v762
        %v1135 = vunpack.c.h.b16 %v762
        %v1136 = vunpack.c.l.b16 %v763
        %v1137 = vunpack.c.h.b16 %v763
        %v1138 = vunpack.c.l.b16 %v764
        %v1139 = vunpack.c.h.b16 %v764
        %v1140 = vunpack.c.l.b16 %v765
        %v1141 = vunpack.c.h.b16 %v765
        %v1142 = vunpack.c.l.b16 %v766
        %v1143 = vunpack.c.h.b16 %v766
        %v1144 = vunpack.c.l.b16 %v767
        %v1145 = vunpack.c.h.b16 %v767
        %v1146 = vunpack.c.l.b16 %v768
        %v1147 = vunpack.c.h.b16 %v768
        %v1148 = vunpack.c.l.b16 %v769
        %v1149 = vunpack.c.h.b16 %v769
        %v1150 = vunpack.c.l.b16 %v770
        %v1151 = vunpack.c.h.b16 %v770
        %v1152 = vunpack.c.l.b16 %v771
        %v1153 = vunpack.c.h.b16 %v771
        %v1154 = vunpack.c.l.b16 %v772
        %v1155 = vunpack.c.h.b16 %v772
        %v1156 = vunpack.c.l.b16 %v773
        %v1157 = vunpack.c.h.b16 %v773
        %v1158 = vunpack.c.l.b16 %v774
        %v1159 = vunpack.c.h.b16 %v774
        %v1160 = vunpack.c.l.b16 %v775
        %v1161 = vunpack.c.h.b16 %v775
        %v1162 = vunpack.c.l.b16 %v776
        %v1163 = vunpack.c.h.b16 %v776
        %v1164 = vunpack.c.l.b16 %v777
        %v1165 = vunpack.c.h.b16 %v777
        %v1166 = vunpack.c.l.b16 %v778
        %v1167 = vunpack.c.h.b16 %v778
        %v1168 = vunpack.c.l.b16 %v779
        %v1169 = vunpack.c.h.b16 %v779
        %v1170 = vunpack.c.l.b16 %v780
        %v1171 = vunpack.c.h.b16 %v780
        %v1172 = vunpack.c.l.b16 %v781
        %v1173 = vunpack.c.h.b16 %v781
        %v1174 = vunpack.c.l.b16 %v782
        %v1175 = vunpack.c.h.b16 %v782
        %v1176 = vunpack.c.l.b16 %v783
        %v1177 = vunpack.c.h.b16 %v783
        %v1178 = vunpack.c.l.b16 %v784
        %v1179 = vunpack.c.h.b16 %v784
        %v1180 = vunpack.c.l.b16 %v785
        %v1181 = vunpack.c.h.b16 %v785
        %v1182 = vunpack.c.l.b16 %v786
        %v1183 = vunpack.c.h.b16 %v786
        %v1184 = vunpack.c.l.b16 %v787
        %v1185 = vunpack.c.h.b16 %v787
        %v1186 = vunpack.c.l.b16 %v788
        %v1187 = vunpack.c.h.b16 %v788
        %v1188 = vunpack.c.l.b16 %v789
        %v1189 = vunpack.c.h.b16 %v789
        %v1190 = vunpack.c.l.b16 %v790
        %v1191 = vunpack.c.h.b16 %v790
        %v1192 = vunpack.c.l.b16 %v791
        %v1193 = vunpack.c.h.b16 %v791
        %v1194 = vunpack.c.l.b16 %v792
        %v1195 = vunpack.c.h.b16 %v792
        %v1196 = vunpack.c.l.b16 %v793
        %v1197 = vunpack.c.h.b16 %v793
        %v1198 = vunpack.c.l.b16 %v794
        %v1199 = vunpack.c.h.b16 %v794
        %v1200 = vunpack.c.l.b16 %v795
        %v1201 = vunpack.c.h.b16 %v795
        %v1202 = vunpack.c.l.b16 %v796
        %v1203 = vunpack.c.h.b16 %v796
        %v1204 = vunpack.c.l.b16 %v797
        %v1205 = vunpack.c.h.b16 %v797
        %v1206 = vunpack.c.l.b16 %v798
        %v1207 = vunpack.c.h.b16 %v798
        %v1208 = vunpack.c.l.b16 %v799
        %v1209 = vunpack.c.h.b16 %v799
        %v1210 = vunpack.c.l.b16 %v800
        %v1211 = vunpack.c.h.b16 %v800
        %v1212 = vunpack.c.l.b16 %v801
        %v1213 = vunpack.c.h.b16 %v801
        %v1214 = vunpack.c.l.b16 %v802
        %v1215 = vunpack.c.h.b16 %v802
        %v1216 = vunpack.c.l.b16 %v803
        %v1217 = vunpack.c.h.b16 %v803
        %v1218 = vunpack.c.l.b16 %v804
        %v1219 = vunpack.c.h.b16 %v804
        %v1220 = vunpack.c.l.b16 %v805
        %v1221 = vunpack.c.h.b16 %v805
        %v1222 = vunpack.c.l.b16 %v806
        %v1223 = vunpack.c.h.b16 %v806
        %v1224 = vunpack.c.l.b16 %v807
        %v1225 = vunpack.c.h.b16 %v807
        %v1226 = vunpack.c.l.b16 %v808
        %v1227 = vunpack.c.h.b16 %v808
        %v1228 = vunpack.c.l.b16 %v809
        %v1229 = vunpack.c.h.b16 %v809
        %v1230 = vpack.c.b16 %v978, %v974
        %v1231 = vpack.c.b16 %v979, %v975
        %v1232 = vpack.c.b16 %v980, %v976
        %v1233 = vpack.c.b16 %v981, %v977
        %v1234 = vpack.c.b16 %v986, %v982
        %v1235 = vpack.c.b16 %v987, %v983
        %v1236 = vpack.c.b16 %v988, %v984
        %v1237 = vpack.c.b16 %v989, %v985
        %v1238 = vpack.c.b16 %v994, %v990
        %v1239 = vpack.c.b16 %v995, %v991
        %v1240 = vpack.c.b16 %v996, %v992
        %v1241 = vpack.c.b16 %v997, %v993
        %v1242 = vpack.c.b16 %v1002, %v998
        %v1243 = vpack.c.b16 %v1003, %v999
        %v1244 = vpack.c.b16 %v1004, %v1000
        %v1245 = vpack.c.b16 %v1005, %v1001
        %v1246 = vpack.c.b16 %v1010, %v1006
        %v1247 = vpack.c.b16 %v1011, %v1007
        %v1248 = vpack.c.b16 %v1012, %v1008
        %v1249 = vpack.c.b16 %v1013, %v1009
        %v1250 = vpack.c.b16 %v1018, %v1014
        %v1251 = vpack.c.b16 %v1019, %v1015
        %v1252 = vpack.c.b16 %v1020, %v1016
        %v1253 = vpack.c.b16 %v1021, %v1017
        %v1254 = vpack.c.b16 %v1026, %v1022
        %v1255 = vpack.c.b16 %v1027, %v1023
        %v1256 = vpack.c.b16 %v1028, %v1024
        %v1257 = vpack.c.b16 %v1029, %v1025
        %v1258 = vpack.c.b16 %v1034, %v1030
        %v1259 = vpack.c.b16 %v1035, %v1031
        %v1260 = vpack.c.b16 %v1036, %v1032
        %v1261 = vpack.c.b16 %v1037, %v1033
        %v1262 = vpack.c.b16 %v1042, %v1038
        %v1263 = vpack.c.b16 %v1043, %v1039
        %v1264 = vpack.c.b16 %v1044, %v1040
        %v1265 = vpack.c.b16 %v1045, %v1041
        %v1266 = vpack.c.b16 %v1050, %v1046
        %v1267 = vpack.c.b16 %v1051, %v1047
        %v1268 = vpack.c.b16 %v1052, %v1048
        %v1269 = vpack.c.b16 %v1053, %v1049
        %v1270 = vpack.c.b16 %v1058, %v1054
        %v1271 = vpack.c.b16 %v1059, %v1055
        %v1272 = vpack.c.b16 %v1060, %v1056
        %v1273 = vpack.c.b16 %v1061, %v1057
        %v1274 = vpack.c.b16 %v1066, %v1062
        %v1275 = vpack.c.b16 %v1067, %v1063
        %v1276 = vpack.c.b16 %v1068, %v1064
        %v1277 = vpack.c.b16 %v1069, %v1065
        %v1278 = vpack.c.b16 %v1074, %v1070
        %v1279 = vpack.c.b16 %v1075, %v1071
        %v1280 = vpack.c.b16 %v1076, %v1072
        %v1281 = vpack.c.b16 %v1077, %v1073
        %v1282 = vpack.c.b16 %v1082, %v1078
        %v1283 = vpack.c.b16 %v1083, %v1079
        %v1284 = vpack.c.b16 %v1084, %v1080
        %v1285 = vpack.c.b16 %v1085, %v1081
        %v1286 = vpack.c.b16 %v1090, %v1086
        %v1287 = vpack.c.b16 %v1091, %v1087
        %v1288 = vpack.c.b16 %v1092, %v1088
        %v1289 = vpack.c.b16 %v1093, %v1089
        %v1290 = vpack.c.b16 %v1098, %v1094
        %v1291 = vpack.c.b16 %v1099, %v1095
        %v1292 = vpack.c.b16 %v1100, %v1096
        %v1293 = vpack.c.b16 %v1101, %v1097
        %v1294 = vpack.c.b16 %v1106, %v1102
        %v1295 = vpack.c.b16 %v1107, %v1103
        %v1296 = vpack.c.b16 %v1108, %v1104
        %v1297 = vpack.c.b16 %v1109, %v1105
        %v1298 = vpack.c.b16 %v1114, %v1110
        %v1299 = vpack.c.b16 %v1115, %v1111
        %v1300 = vpack.c.b16 %v1116, %v1112
        %v1301 = vpack.c.b16 %v1117, %v1113
        %v1302 = vpack.c.b16 %v1122, %v1118
        %v1303 = vpack.c.b16 %v1123, %v1119
        %v1304 = vpack.c.b16 %v1124, %v1120
        %v1305 = vpack.c.b16 %v1125, %v1121
        %v1306 = vpack.c.b16 %v1130, %v1126
        %v1307 = vpack.c.b16 %v1131, %v1127
        %v1308 = vpack.c.b16 %v1132, %v1128
        %v1309 = vpack.c.b16 %v1133, %v1129
        %v1310 = vpack.c.b16 %v1138, %v1134
        %v1311 = vpack.c.b16 %v1139, %v1135
        %v1312 = vpack.c.b16 %v1140, %v1136
        %v1313 = vpack.c.b16 %v1141, %v1137
        %v1314 = vpack.c.b16 %v1146, %v1142
        %v1315 = vpack.c.b16 %v1147, %v1143
        %v1316 = vpack.c.b16 %v1148, %v1144
        %v1317 = vpack.c.b16 %v1149, %v1145
        %v1318 = vpack.c.b16 %v1154, %v1150
        %v1319 = vpack.c.b16 %v1155, %v1151
        %v1320 = vpack.c.b16 %v1156, %v1152
        %v1321 = vpack.c.b16 %v1157, %v1153
        %v1322 = vpack.c.b16 %v1162, %v1158
        %v1323 = vpack.c.b16 %v1163, %v1159
        %v1324 = vpack.c.b16 %v1164, %v1160
        %v1325 = vpack.c.b16 %v1165, %v1161
        %v1326 = vpack.c.b16 %v1170, %v1166
        %v1327 = vpack.c.b16 %v1171, %v1167
        %v1328 = vpack.c.b16 %v1172, %v1168
        %v1329 = vpack.c.b16 %v1173, %v1169
        %v1330 = vpack.c.b16 %v1178, %v1174
        %v1331 = vpack.c.b16 %v1179, %v1175
        %v1332 = vpack.c.b16 %v1180, %v1176
        %v1333 = vpack.c.b16 %v1181, %v1177
        %v1334 = vpack.c.b16 %v1186, %v1182
        %v1335 = vpack.c.b16 %v1187, %v1183
        %v1336 = vpack.c.b16 %v1188, %v1184
        %v1337 = vpack.c.b16 %v1189, %v1185
        %v1338 = vpack.c.b16 %v1194, %v1190
        %v1339 = vpack.c.b16 %v1195, %v1191
        %v1340 = vpack.c.b16 %v1196, %v1192
        %v1341 = vpack.c.b16 %v1197, %v1193
        %v1342 = vpack.c.b16 %v1202, %v1198
        %v1343 = vpack.c.b16 %v1203, %v1199
        %v1344 = vpack.c.b16 %v1204, %v1200
        %v1345 = vpack.c.b16 %v1205, %v1201
        %v1346 = vpack.c.b16 %v1210, %v1206
        %v1347 = vpack.c.b16 %v1211, %v1207
        %v1348 = vpack.c.b16 %v1212, %v1208
        %v1349 = vpack.c.b16 %v1213, %v1209
        %v1350 = vpack.c.b16 %v1218, %v1214
        %v1351 = vpack.c.b16 %v1219, %v1215
        %v1352 = vpack.c.b16 %v1220, %v1216
        %v1353 = vpack.c.b16 %v1221, %v1217
        %v1354 = vpack.c.b16 %v1226, %v1222
        %v1355 = vpack.c.b16 %v1227, %v1223
        %v1356 = vpack.c.b16 %v1228, %v1224
        %v1357 = vpack.c.b16 %v1229, %v1225
        %1486 = vmatprep.subr.bf16.mxu0 %v1259
        %1487 = vmatpush1.bf16.msra.mxu0 %v1258
        %1488 = vmatprep.subr.bf16.mxu0 %v1255
        %1489 = vmatpush1.bf16.msra.mxu0 %v1254
        %1490 = vmatprep.subr.bf16.mxu0 %v1251
        %1491 = vmatpush1.bf16.msra.mxu0 %v1250
        %1492 = vmatprep.subr.bf16.mxu0 %v1247
        %1493 = vmatpush1.bf16.msra.mxu0 %v1246
        %1494 = vmatprep.subr.bf16.mxu0 %v1243
        %1495 = vmatpush1.bf16.msra.mxu0 %v1242
        %1496 = vmatprep.subr.bf16.mxu0 %v1239
        %1497 = vmatpush1.bf16.msra.mxu0 %v1238
        %1498 = vmatprep.subr.bf16.mxu0 %v1235
        %1499 = vmatpush1.bf16.msra.mxu0 %v1234
        %1500 = vmatprep.subr.bf16.mxu0 %v1231
        %1501 = vmatpush1.bf16.msra.mxu0 %v1230
        %1502 = vmatprep.subr.bf16.mxu0 %v1291
        %1503 = vmatpush2.bf16.msra.mxu0 %v1290
        %1504 = vmatprep.subr.bf16.mxu0 %v1287
        %1505 = vmatpush2.bf16.msra.mxu0 %v1286
        %1506 = vmatprep.subr.bf16.mxu0 %v1283
        %1507 = vmatpush2.bf16.msra.mxu0 %v1282
        %1508 = vmatprep.subr.bf16.mxu0 %v1279
        %1509 = vmatpush2.bf16.msra.mxu0 %v1278
        %1510 = vmatprep.subr.bf16.mxu0 %v1275
        %1511 = vmatpush2.bf16.msra.mxu0 %v1274
        %1512 = vmatprep.subr.bf16.mxu0 %v1271
        %1513 = vmatpush2.bf16.msra.mxu0 %v1270
        %1514 = vmatprep.subr.bf16.mxu0 %v1267
        %1515 = vmatpush2.bf16.msra.mxu0 %v1266
        %1516 = vmatprep.subr.bf16.mxu0 %v1263
        %1517 = vmatpush2.bf16.msra.mxu0 %v1262
        %1518 = vmatprep.mubr.bf16.mxu0 %v679
        %1519 = vmatmul.mubr.bf16.gmra.mxu0 %v678
        %v1520 = vpop.f32.mrf.mxu0
        %v1521 = vadd.f32 %v833, %v1520
        %v1522 = vpop.f32.mrf.mxu0
        %v1523 = vadd.f32 %v837, %v1522
        %v1524 = vpop.f32.mrf.mxu0
        %v1525 = vpop.f32.mrf.mxu0
        %1526 = vdwg.mxu0
        %1527 = vmatprep.subr.bf16.mxu0 %v1323
        %1528 = vmatpush1.bf16.msra.mxu0 %v1322
        %1529 = vmatprep.subr.bf16.mxu0 %v1319
        %1530 = vmatpush1.bf16.msra.mxu0 %v1318
        %1531 = vmatprep.subr.bf16.mxu0 %v1315
        %1532 = vmatpush1.bf16.msra.mxu0 %v1314
        %1533 = vmatprep.subr.bf16.mxu0 %v1311
        %1534 = vmatpush1.bf16.msra.mxu0 %v1310
        %1535 = vmatprep.subr.bf16.mxu0 %v1307
        %1536 = vmatpush1.bf16.msra.mxu0 %v1306
        %1537 = vmatprep.subr.bf16.mxu0 %v1303
        %1538 = vmatpush1.bf16.msra.mxu0 %v1302
        %1539 = vmatprep.subr.bf16.mxu0 %v1299
        %1540 = vmatpush1.bf16.msra.mxu0 %v1298
        %1541 = vmatprep.subr.bf16.mxu0 %v1295
        %1542 = vmatpush1.bf16.msra.mxu0 %v1294
        %1543 = vmatprep.subr.bf16.mxu0 %v1355
        %1544 = vmatpush2.bf16.msra.mxu0 %v1354
        %1545 = vmatprep.subr.bf16.mxu0 %v1351
        %1546 = vmatpush2.bf16.msra.mxu0 %v1350
        %1547 = vmatprep.subr.bf16.mxu0 %v1347
        %1548 = vmatpush2.bf16.msra.mxu0 %v1346
        %1549 = vmatprep.subr.bf16.mxu0 %v1343
        %1550 = vmatpush2.bf16.msra.mxu0 %v1342
        %1551 = vmatprep.subr.bf16.mxu0 %v1339
        %1552 = vmatpush2.bf16.msra.mxu0 %v1338
        %1553 = vmatprep.subr.bf16.mxu0 %v1335
        %1554 = vmatpush2.bf16.msra.mxu0 %v1334
        %1555 = vmatprep.subr.bf16.mxu0 %v1331
        %1556 = vmatpush2.bf16.msra.mxu0 %v1330
        %1557 = vmatprep.subr.bf16.mxu0 %v1327
        %1558 = vmatpush2.bf16.msra.mxu0 %v1326
        %1559 = vmatprep.mubr.bf16.mxu0 %v681
        %1560 = vmatmul.mubr.bf16.gmra.mxu0 %v680
        %v1561 = vpop.f32.mrf.mxu0
        %v1562 = vadd.f32 %v1521, %v1561
        %v1563 = vpop.f32.mrf.mxu0
        %v1564 = vadd.f32 %v1523, %v1563
        %v1565 = vpop.f32.mrf.mxu0
        %v1566 = vpop.f32.mrf.mxu0
        %1567 = vdwg.mxu0
        %1568 = vmatprep.subr.bf16.mxu0 %v1261
        %1569 = vmatpush1.bf16.msra.mxu0 %v1260
        %1570 = vmatprep.subr.bf16.mxu0 %v1257
        %1571 = vmatpush1.bf16.msra.mxu0 %v1256
        %1572 = vmatprep.subr.bf16.mxu0 %v1253
        %1573 = vmatpush1.bf16.msra.mxu0 %v1252
        %1574 = vmatprep.subr.bf16.mxu0 %v1249
        %1575 = vmatpush1.bf16.msra.mxu0 %v1248
        %1576 = vmatprep.subr.bf16.mxu0 %v1245
        %1577 = vmatpush1.bf16.msra.mxu0 %v1244
        %1578 = vmatprep.subr.bf16.mxu0 %v1241
        %1579 = vmatpush1.bf16.msra.mxu0 %v1240
        %1580 = vmatprep.subr.bf16.mxu0 %v1237
        %1581 = vmatpush1.bf16.msra.mxu0 %v1236
        %1582 = vmatprep.subr.bf16.mxu0 %v1233
        %1583 = vmatpush1.bf16.msra.mxu0 %v1232
        %1584 = vmatprep.subr.bf16.mxu0 %v1293
        %1585 = vmatpush2.bf16.msra.mxu0 %v1292
        %1586 = vmatprep.subr.bf16.mxu0 %v1289
        %1587 = vmatpush2.bf16.msra.mxu0 %v1288
        %1588 = vmatprep.subr.bf16.mxu0 %v1285
        %1589 = vmatpush2.bf16.msra.mxu0 %v1284
        %1590 = vmatprep.subr.bf16.mxu0 %v1281
        %1591 = vmatpush2.bf16.msra.mxu0 %v1280
        %1592 = vmatprep.subr.bf16.mxu0 %v1277
        %1593 = vmatpush2.bf16.msra.mxu0 %v1276
        %1594 = vmatprep.subr.bf16.mxu0 %v1273
        %1595 = vmatpush2.bf16.msra.mxu0 %v1272
        %1596 = vmatprep.subr.bf16.mxu0 %v1269
        %1597 = vmatpush2.bf16.msra.mxu0 %v1268
        %1598 = vmatprep.subr.bf16.mxu0 %v1265
        %1599 = vmatpush2.bf16.msra.mxu0 %v1264
        %1600 = vmatprep.mubr.bf16.mxu0 %v679
        %1601 = vmatmul.mubr.bf16.gmra.mxu0 %v678
        %v1602 = vpop.f32.mrf.mxu0
        %v1603 = vadd.f32 %v841, %v1602
        %v1604 = vpop.f32.mrf.mxu0
        %v1605 = vadd.f32 %v845, %v1604
        %v1606 = vpop.f32.mrf.mxu0
        %v1607 = vpop.f32.mrf.mxu0
        %1608 = vdwg.mxu0
        %1609 = vmatprep.subr.bf16.mxu0 %v1325
        %1610 = vmatpush1.bf16.msra.mxu0 %v1324
        %1611 = vmatprep.subr.bf16.mxu0 %v1321
        %1612 = vmatpush1.bf16.msra.mxu0 %v1320
        %1613 = vmatprep.subr.bf16.mxu0 %v1317
        %1614 = vmatpush1.bf16.msra.mxu0 %v1316
        %1615 = vmatprep.subr.bf16.mxu0 %v1313
        %1616 = vmatpush1.bf16.msra.mxu0 %v1312
        %1617 = vmatprep.subr.bf16.mxu0 %v1309
        %1618 = vmatpush1.bf16.msra.mxu0 %v1308
        %1619 = vmatprep.subr.bf16.mxu0 %v1305
        %1620 = vmatpush1.bf16.msra.mxu0 %v1304
        %1621 = vmatprep.subr.bf16.mxu0 %v1301
        %1622 = vmatpush1.bf16.msra.mxu0 %v1300
        %1623 = vmatprep.subr.bf16.mxu0 %v1297
        %1624 = vmatpush1.bf16.msra.mxu0 %v1296
        %1625 = vmatprep.subr.bf16.mxu0 %v1357
        %1626 = vmatpush2.bf16.msra.mxu0 %v1356
        %1627 = vmatprep.subr.bf16.mxu0 %v1353
        %1628 = vmatpush2.bf16.msra.mxu0 %v1352
        %1629 = vmatprep.subr.bf16.mxu0 %v1349
        %1630 = vmatpush2.bf16.msra.mxu0 %v1348
        %1631 = vmatprep.subr.bf16.mxu0 %v1345
        %1632 = vmatpush2.bf16.msra.mxu0 %v1344
        %1633 = vmatprep.subr.bf16.mxu0 %v1341
        %1634 = vmatpush2.bf16.msra.mxu0 %v1340
        %1635 = vmatprep.subr.bf16.mxu0 %v1337
        %1636 = vmatpush2.bf16.msra.mxu0 %v1336
        %1637 = vmatprep.subr.bf16.mxu0 %v1333
        %1638 = vmatpush2.bf16.msra.mxu0 %v1332
        %1639 = vmatprep.subr.bf16.mxu0 %v1329
        %1640 = vmatpush2.bf16.msra.mxu0 %v1328
        %1641 = vmatprep.mubr.bf16.mxu0 %v681
        %1642 = vmatmul.mubr.bf16.gmra.mxu0 %v680
        %v1643 = vpop.f32.mrf.mxu0
        %v1644 = vadd.f32 %v1603, %v1643
        %v1645 = vpop.f32.mrf.mxu0
        %v1646 = vadd.f32 %v1605, %v1645
        %v1647 = vpop.f32.mrf.mxu0
        %v1648 = vpop.f32.mrf.mxu0
        %1649 = vdwg.mxu0
        %v1650 = vmax.f32 %v1562, 0.0
        %v1651 = vmax.f32 %v1564, 0.0
        %v1652 = vmax.f32 %v1644, 0.0
        %v1653 = vmax.f32 %v1646, 0.0
        %v1654 = vpack.c.bf16 %v1650, %v1650
        %v1655 = vpack.c.bf16 %v1651, %v1651
        %v1656 = vpack.c.bf16 %v1652, %v1652
        %v1657 = vpack.c.bf16 %v1653, %v1653
        %v1658 = vld [vmem:[%s367] sm:$0xf]
        %v1659 = vld [vmem:[%s367 + $0x4] sm:$0xf]
        %v1660 = vld [vmem:[%s367 + $0x8] sm:$0xf]
        %v1661 = vld [vmem:[%s367 + $0xc] sm:$0xf]
        %v1662 = vld [vmem:[%s367 + $0x10] sm:$0xf]
        %v1663 = vld [vmem:[%s367 + $0x14] sm:$0xf]
        %v1664 = vld [vmem:[%s367 + $0x18] sm:$0xf]
        %v1665 = vld [vmem:[%s367 + $0x1c] sm:$0xf]
        %v1666 = vld [vmem:[%s367 + $0x20] sm:$0xf]
        %v1667 = vld [vmem:[%s367 + $0x24] sm:$0xf]
        %v1668 = vld [vmem:[%s367 + $0x28] sm:$0xf]
        %v1669 = vld [vmem:[%s367 + $0x2c] sm:$0xf]
        %v1670 = vld [vmem:[%s367 + $0x30] sm:$0xf]
        %v1671 = vld [vmem:[%s367 + $0x34] sm:$0xf]
        %v1672 = vld [vmem:[%s367 + $0x38] sm:$0xf]
        %v1673 = vld [vmem:[%s367 + $0x3c] sm:$0xf]
        %v1674 = vld [vmem:[%s367 + $0x40] sm:$0xf]
        %v1675 = vld [vmem:[%s367 + $0x44] sm:$0xf]
        %v1676 = vld [vmem:[%s367 + $0x48] sm:$0xf]
        %v1677 = vld [vmem:[%s367 + $0x4c] sm:$0xf]
        %v1678 = vld [vmem:[%s367 + $0x50] sm:$0xf]
        %v1679 = vld [vmem:[%s367 + $0x54] sm:$0xf]
        %v1680 = vld [vmem:[%s367 + $0x58] sm:$0xf]
        %v1681 = vld [vmem:[%s367 + $0x5c] sm:$0xf]
        %v1682 = vld [vmem:[%s367 + $0x60] sm:$0xf]
        %v1683 = vld [vmem:[%s367 + $0x64] sm:$0xf]
        %v1684 = vld [vmem:[%s367 + $0x68] sm:$0xf]
        %v1685 = vld [vmem:[%s367 + $0x6c] sm:$0xf]
        %v1686 = vld [vmem:[%s367 + $0x70] sm:$0xf]
        %v1687 = vld [vmem:[%s367 + $0x74] sm:$0xf]
        %v1688 = vld [vmem:[%s367 + $0x78] sm:$0xf]
        %v1689 = vld [vmem:[%s367 + $0x7c] sm:$0xf]
        %v1690 = vld [vmem:[%s367 + $0x80] sm:$0xf]
        %v1691 = vld [vmem:[%s367 + $0x84] sm:$0xf]
        %v1692 = vld [vmem:[%s367 + $0x88] sm:$0xf]
        %v1693 = vld [vmem:[%s367 + $0x8c] sm:$0xf]
        %v1694 = vld [vmem:[%s367 + $0x90] sm:$0xf]
        %v1695 = vld [vmem:[%s367 + $0x94] sm:$0xf]
        %v1696 = vld [vmem:[%s367 + $0x98] sm:$0xf]
        %v1697 = vld [vmem:[%s367 + $0x9c] sm:$0xf]
        %v1698 = vld [vmem:[%s367 + $0xa0] sm:$0xf]
        %v1699 = vld [vmem:[%s367 + $0xa4] sm:$0xf]
        %v1700 = vld [vmem:[%s367 + $0xa8] sm:$0xf]
        %v1701 = vld [vmem:[%s367 + $0xac] sm:$0xf]
        %v1702 = vld [vmem:[%s367 + $0xb0] sm:$0xf]
        %v1703 = vld [vmem:[%s367 + $0xb4] sm:$0xf]
        %v1704 = vld [vmem:[%s367 + $0xb8] sm:$0xf]
        %v1705 = vld [vmem:[%s367 + $0xbc] sm:$0xf]
        %v1706 = vld [vmem:[%s367 + $0xc0] sm:$0xf]
        %v1707 = vld [vmem:[%s367 + $0xc4] sm:$0xf]
        %v1708 = vld [vmem:[%s367 + $0xc8] sm:$0xf]
        %v1709 = vld [vmem:[%s367 + $0xcc] sm:$0xf]
        %v1710 = vld [vmem:[%s367 + $0xd0] sm:$0xf]
        %v1711 = vld [vmem:[%s367 + $0xd4] sm:$0xf]
        %v1712 = vld [vmem:[%s367 + $0xd8] sm:$0xf]
        %v1713 = vld [vmem:[%s367 + $0xdc] sm:$0xf]
        %v1714 = vld [vmem:[%s367 + $0xe0] sm:$0xf]
        %v1715 = vld [vmem:[%s367 + $0xe4] sm:$0xf]
        %v1716 = vld [vmem:[%s367 + $0xe8] sm:$0xf]
        %v1717 = vld [vmem:[%s367 + $0xec] sm:$0xf]
        %v1718 = vld [vmem:[%s367 + $0xf0] sm:$0xf]
        %v1719 = vld [vmem:[%s367 + $0xf4] sm:$0xf]
        %v1720 = vld [vmem:[%s367 + $0xf8] sm:$0xf]
        %v1721 = vld [vmem:[%s367 + $0xfc] sm:$0xf]
        %v1722 = vlaneseq
        %v1723 = vshrl.u32 %v1722, 7
        %v1724 = vsub.s32 2, %v1723
        %v1725 = vrot.slane %v382, %v1724
        %v1790 = vunpack.c.l.b16 %v1658
        %v1791 = vunpack.c.l.b16 %v1659
        %v1792 = vunpack.c.l.b16 %v1660
        %v1793 = vunpack.c.l.b16 %v1661
        %v1794 = vunpack.c.l.b16 %v1662
        %v1795 = vunpack.c.l.b16 %v1663
        %v1796 = vunpack.c.l.b16 %v1664
        %v1797 = vunpack.c.l.b16 %v1665
        %v1798 = vunpack.c.l.b16 %v1666
        %v1799 = vunpack.c.l.b16 %v1667
        %v1800 = vunpack.c.l.b16 %v1668
        %v1801 = vunpack.c.l.b16 %v1669
        %v1802 = vunpack.c.l.b16 %v1670
        %v1803 = vunpack.c.l.b16 %v1671
        %v1804 = vunpack.c.l.b16 %v1672
        %v1805 = vunpack.c.l.b16 %v1673
        %v1806 = vunpack.c.l.b16 %v1674
        %v1807 = vunpack.c.l.b16 %v1675
        %v1808 = vunpack.c.l.b16 %v1676
        %v1809 = vunpack.c.l.b16 %v1677
        %v1810 = vunpack.c.l.b16 %v1678
        %v1811 = vunpack.c.l.b16 %v1679
        %v1812 = vunpack.c.l.b16 %v1680
        %v1813 = vunpack.c.l.b16 %v1681
        %v1814 = vunpack.c.l.b16 %v1682
        %v1815 = vunpack.c.l.b16 %v1683
        %v1816 = vunpack.c.l.b16 %v1684
        %v1817 = vunpack.c.l.b16 %v1685
        %v1818 = vunpack.c.l.b16 %v1686
        %v1819 = vunpack.c.l.b16 %v1687
        %v1820 = vunpack.c.l.b16 %v1688
        %v1821 = vunpack.c.l.b16 %v1689
        %v1822 = vunpack.c.l.b16 %v1690
        %v1823 = vunpack.c.l.b16 %v1691
        %v1824 = vunpack.c.l.b16 %v1692
        %v1825 = vunpack.c.l.b16 %v1693
        %v1826 = vunpack.c.l.b16 %v1694
        %v1827 = vunpack.c.l.b16 %v1695
        %v1828 = vunpack.c.l.b16 %v1696
        %v1829 = vunpack.c.l.b16 %v1697
        %v1830 = vunpack.c.l.b16 %v1698
        %v1831 = vunpack.c.l.b16 %v1699
        %v1832 = vunpack.c.l.b16 %v1700
        %v1833 = vunpack.c.l.b16 %v1701
        %v1834 = vunpack.c.l.b16 %v1702
        %v1835 = vunpack.c.l.b16 %v1703
        %v1836 = vunpack.c.l.b16 %v1704
        %v1837 = vunpack.c.l.b16 %v1705
        %v1838 = vunpack.c.l.b16 %v1706
        %v1839 = vunpack.c.l.b16 %v1707
        %v1840 = vunpack.c.l.b16 %v1708
        %v1841 = vunpack.c.l.b16 %v1709
        %v1842 = vunpack.c.l.b16 %v1710
        %v1843 = vunpack.c.l.b16 %v1711
        %v1844 = vunpack.c.l.b16 %v1712
        %v1845 = vunpack.c.l.b16 %v1713
        %v1846 = vunpack.c.l.b16 %v1714
        %v1847 = vunpack.c.l.b16 %v1715
        %v1848 = vunpack.c.l.b16 %v1716
        %v1849 = vunpack.c.l.b16 %v1717
        %v1850 = vunpack.c.l.b16 %v1718
        %v1851 = vunpack.c.l.b16 %v1719
        %v1852 = vunpack.c.l.b16 %v1720
        %v1853 = vunpack.c.l.b16 %v1721
        %v1854 = vpack.c.b16 %v1791, %v1790
        %v1855 = vpack.c.b16 %v1793, %v1792
        %v1856 = vpack.c.b16 %v1795, %v1794
        %v1857 = vpack.c.b16 %v1797, %v1796
        %v1858 = vpack.c.b16 %v1799, %v1798
        %v1859 = vpack.c.b16 %v1801, %v1800
        %v1860 = vpack.c.b16 %v1803, %v1802
        %v1861 = vpack.c.b16 %v1805, %v1804
        %v1862 = vpack.c.b16 %v1807, %v1806
        %v1863 = vpack.c.b16 %v1809, %v1808
        %v1864 = vpack.c.b16 %v1811, %v1810
        %v1865 = vpack.c.b16 %v1813, %v1812
        %v1866 = vpack.c.b16 %v1815, %v1814
        %v1867 = vpack.c.b16 %v1817, %v1816
        %v1868 = vpack.c.b16 %v1819, %v1818
        %v1869 = vpack.c.b16 %v1821, %v1820
        %v1870 = vpack.c.b16 %v1823, %v1822
        %v1871 = vpack.c.b16 %v1825, %v1824
        %v1872 = vpack.c.b16 %v1827, %v1826
        %v1873 = vpack.c.b16 %v1829, %v1828
        %v1874 = vpack.c.b16 %v1831, %v1830
        %v1875 = vpack.c.b16 %v1833, %v1832
        %v1876 = vpack.c.b16 %v1835, %v1834
        %v1877 = vpack.c.b16 %v1837, %v1836
        %v1878 = vpack.c.b16 %v1839, %v1838
        %v1879 = vpack.c.b16 %v1841, %v1840
        %v1880 = vpack.c.b16 %v1843, %v1842
        %v1881 = vpack.c.b16 %v1845, %v1844
        %v1882 = vpack.c.b16 %v1847, %v1846
        %v1883 = vpack.c.b16 %v1849, %v1848
        %v1884 = vpack.c.b16 %v1851, %v1850
        %v1885 = vpack.c.b16 %v1853, %v1852
        %1918 = vmatprep.subr.bf16.mxu0 0
        %1919 = vmatpush1.bf16.msra.mxu0 %v1861
        %1920 = vmatprep.subr.bf16.mxu0 0
        %1921 = vmatpush1.bf16.msra.mxu0 %v1860
        %1922 = vmatprep.subr.bf16.mxu0 0
        %1923 = vmatpush1.bf16.msra.mxu0 %v1859
        %1924 = vmatprep.subr.bf16.mxu0 0
        %1925 = vmatpush1.bf16.msra.mxu0 %v1858
        %1926 = vmatprep.subr.bf16.mxu0 0
        %1927 = vmatpush1.bf16.msra.mxu0 %v1857
        %1928 = vmatprep.subr.bf16.mxu0 0
        %1929 = vmatpush1.bf16.msra.mxu0 %v1856
        %1930 = vmatprep.subr.bf16.mxu0 0
        %1931 = vmatpush1.bf16.msra.mxu0 %v1855
        %1932 = vmatprep.subr.bf16.mxu0 0
        %1933 = vmatpush1.bf16.msra.mxu0 %v1854
        %1934 = vmatprep.subr.bf16.mxu0 0
        %1935 = vmatpush2.bf16.msra.mxu0 %v1869
        %1936 = vmatprep.subr.bf16.mxu0 0
        %1937 = vmatpush2.bf16.msra.mxu0 %v1868
        %1938 = vmatprep.subr.bf16.mxu0 0
        %1939 = vmatpush2.bf16.msra.mxu0 %v1867
        %1940 = vmatprep.subr.bf16.mxu0 0
        %1941 = vmatpush2.bf16.msra.mxu0 %v1866
        %1942 = vmatprep.subr.bf16.mxu0 0
        %1943 = vmatpush2.bf16.msra.mxu0 %v1865
        %1944 = vmatprep.subr.bf16.mxu0 0
        %1945 = vmatpush2.bf16.msra.mxu0 %v1864
        %1946 = vmatprep.subr.bf16.mxu0 0
        %1947 = vmatpush2.bf16.msra.mxu0 %v1863
        %1948 = vmatprep.subr.bf16.mxu0 0
        %1949 = vmatpush2.bf16.msra.mxu0 %v1862
        %1950 = vmatprep.mubr.bf16.mxu0 %v1655
        %1951 = vmatmul.mubr.bf16.gmra.mxu0 %v1654
        %v1952 = vpop.f32.mrf.mxu0
        %v1953 = vadd.f32 %v1725, %v1952
        %v1954 = vpop.f32.mrf.mxu0
        %v1955 = vpop.f32.mrf.mxu0
        %v1956 = vpop.f32.mrf.mxu0
        %1957 = vdwg.mxu0
        %1958 = vmatprep.subr.bf16.mxu0 0
        %1959 = vmatpush1.bf16.msra.mxu0 %v1877
        %1960 = vmatprep.subr.bf16.mxu0 0
        %1961 = vmatpush1.bf16.msra.mxu0 %v1876
        %1962 = vmatprep.subr.bf16.mxu0 0
        %1963 = vmatpush1.bf16.msra.mxu0 %v1875
        %1964 = vmatprep.subr.bf16.mxu0 0
        %1965 = vmatpush1.bf16.msra.mxu0 %v1874
        %1966 = vmatprep.subr.bf16.mxu0 0
        %1967 = vmatpush1.bf16.msra.mxu0 %v1873
        %1968 = vmatprep.subr.bf16.mxu0 0
        %1969 = vmatpush1.bf16.msra.mxu0 %v1872
        %1970 = vmatprep.subr.bf16.mxu0 0
        %1971 = vmatpush1.bf16.msra.mxu0 %v1871
        %1972 = vmatprep.subr.bf16.mxu0 0
        %1973 = vmatpush1.bf16.msra.mxu0 %v1870
        %1974 = vmatprep.subr.bf16.mxu0 0
        %1975 = vmatpush2.bf16.msra.mxu0 %v1885
        %1976 = vmatprep.subr.bf16.mxu0 0
        %1977 = vmatpush2.bf16.msra.mxu0 %v1884
        %1978 = vmatprep.subr.bf16.mxu0 0
        %1979 = vmatpush2.bf16.msra.mxu0 %v1883
        %1980 = vmatprep.subr.bf16.mxu0 0
        %1981 = vmatpush2.bf16.msra.mxu0 %v1882
        %1982 = vmatprep.subr.bf16.mxu0 0
        %1983 = vmatpush2.bf16.msra.mxu0 %v1881
        %1984 = vmatprep.subr.bf16.mxu0 0
        %1985 = vmatpush2.bf16.msra.mxu0 %v1880
        %1986 = vmatprep.subr.bf16.mxu0 0
        %1987 = vmatpush2.bf16.msra.mxu0 %v1879
        %1988 = vmatprep.subr.bf16.mxu0 0
        %1989 = vmatpush2.bf16.msra.mxu0 %v1878
        %1990 = vmatprep.mubr.bf16.mxu0 %v1657
        %1991 = vmatmul.mubr.bf16.gmra.mxu0 %v1656
        %v1992 = vpop.f32.mrf.mxu0
        %v1993 = vadd.f32 %v1953, %v1992
        %v1994 = vpop.f32.mrf.mxu0
        %v1995 = vpop.f32.mrf.mxu0
        %v1996 = vpop.f32.mrf.mxu0
        %1997 = vdwg.mxu0
        %vm1998 = vcmask 7168
        %1999 = vst.msk [vmem:[%s376] sm:$0xff] %vm1998, %v1993
        %p2000 = scmp.lt.s32.totalorder %s21, 1
        %s2001 = scalar_select %p2000, %s21, 1
        %s2002 = smul.addr %s2001, 8
        %s2003 = scalar_lea.vmem %s7, %s2002
        // Predicated region
        $region53: #{tpu_custom_call.1} parent=47 // pred_check
          %p2004 = pneg %p211
        $region54: #{tpu_custom_call.1} parent=47 // pred_check_branch
          %2006 = sbr.rel (%p2004) target = $region56
        $region55: #{tpu_custom_call.1} parent=47 // pred_region
          _
        $region56: #{tpu_custom_call.1} parent=47 // pred_fallthru
          _
      $region48: #{tpu_custom_call.1} parent=5 // pred_fallthru
        _
      %p2007 = scmp.le.s32.totalorder 2, %s16
      // Predicated region
      $region57: #{tpu_custom_call.1} parent=5 // pred_check
        %p2008 = pneg %p2007
      $region58: #{tpu_custom_call.1} parent=5 // pred_check_branch
        %2010 = sbr.rel (%p2008) target = $region60
      $region59: #{tpu_custom_call.1} parent=5 // pred_region
        %s2011 = ssub.s32 %s16, 2
        // Predicated region
        $region61: #{tpu_custom_call.1} parent=59 // pred_check
          %p2012 = pneg %p217
        $region62: #{tpu_custom_call.1} parent=59 // pred_check_branch
          %2014 = sbr.rel (%p2012) target = $region64
        $region63: #{tpu_custom_call.1} parent=59 // pred_region
          %p2015 = scmp.lt.s32.totalorder %s22, 1
          %s2016 = scalar_select %p2015, %s22, 1
          %s2017 = smul.addr %s2016, 8
          %s2018 = scalar_lea.vmem %s7, %s2017
        $region64: #{tpu_custom_call.1} parent=59 // pred_fallthru
          _
      $region60: #{tpu_custom_call.1} parent=5 // pred_fallthru
        _
    $region6: #{tpu_custom_call.1} parent=1 // loop_footer
      %s20 = sadd.s32 1, %s16
    $region7: #{tpu_custom_call.1} parent=1 // loop_footer_branch
      %15 = sbr.rel target = $region3
    $region8: #{tpu_custom_call.1} parent=1 // loop_exit
      _
    %2019 = vsyncpa [#allocation3], 1
    %s2020 = scalar_lea.sflag [#allocation3], 1
    %2021 = vsyncpa %s2020, 1

</llo_original>
